<compile_context>
chip_gen: v7x
topology: tpu7x:2x2x1
jax: 0.10.0
libtpu: 0.0.40
codegen_flags: <defaults>
</compile_context>

<pallas_src>
import functools

import numpy as np
import jax
import jax.numpy as jnp
from jax.experimental import pallas as pl
from jax.experimental.pallas import tpu as pltpu


# ----------------------------------------------------------------------------
# small helpers
# ----------------------------------------------------------------------------
def _zero_halo(pad_ref):
    """Zero only the 1-pixel halo of a (nb, hp+2, wp+2, c) padded scratch."""
    nb, hpp, wpp, c = pad_ref.shape
    hp, wp = hpp - 2, wpp - 2
    zrow = jnp.zeros((nb, 1, wpp, c), pad_ref.dtype)
    zcol = jnp.zeros((nb, hp, 1, c), pad_ref.dtype)
    pad_ref[:, 0:1, :, :] = zrow
    pad_ref[:, hp + 1:hp + 2, :, :] = zrow
    pad_ref[:, 1:hp + 1, 0:1, :] = zcol
    pad_ref[:, 1:hp + 1, wp + 1:wp + 2, :] = zcol


# ----------------------------------------------------------------------------
# Pallas kernel: one batch-block per grid step
# ----------------------------------------------------------------------------
def _unet_down_kernel(x_ref, w1_ref, b1_ref, w2_ref, b2_ref, out_ref,
                      pad1_ref, col1_ref, pad2_ref, col2_ref,
                      *, nb, hp, wp, c1, c2, slope):
    cdt = pad1_ref.dtype
    m = nb * hp * wp

    # ---- MaxPool2d(2) on the NHWC block -----------------------------------
    # x_ref block: (nb, 2*hp, wp, 2*c1) -- the two W-neighbours of every
    # pooling window were paired into adjacent lane halves by a FREE reshape
    # in the wrapper, so the W-max is a static lane slice and the H-max a
    # layout-preserving leading-dim regroup (no strided access in-kernel).
    x = x_ref[...].astype(jnp.float32)
    xw = jnp.maximum(x[..., :c1], x[..., c1:])                 # max over W pairs
    xw = xw.reshape(nb, hp, 2, wp, c1)                         # split H only
    pooled = jnp.maximum(xw[:, :, 0], xw[:, :, 1])             # (nb, hp, wp, c1)

    # ---- ConvNormAct #1: im2col + ONE GEMM + bias + LeakyReLU --------------
    # (BatchNorm2d running stats folded exactly into w1/b1 in the wrapper.)
    _zero_halo(pad1_ref)                                       # halo only, every step
    pad1_ref[:, 1:hp + 1, 1:wp + 1, :] = pooled.astype(cdt)
    for k in range(9):                                         # one pass of shifted copies
        dy, dx = divmod(k, 3)
        col1_ref[:, k * c1:(k + 1) * c1] = (
            pad1_ref[:, dy:dy + hp, dx:dx + wp, :].reshape(m, c1))
    acc1 = jnp.dot(col1_ref[...], w1_ref[...],
                   preferred_element_type=jnp.float32)         # (m, c2), K = 9*c1
    acc1 = acc1 + b1_ref[...]
    y1 = jnp.where(acc1 >= 0.0, acc1, slope * acc1)

    # nn.Dropout between the two ConvNormAct blocks: identity (eval mode).
    # TODO(synk): training-mode Dropout / batch-statistic BatchNorm not implemented.

    # ---- ConvNormAct #2 -----------------------------------------------------
    _zero_halo(pad2_ref)
    pad2_ref[:, 1:hp + 1, 1:wp + 1, :] = y1.reshape(nb, hp, wp, c2).astype(cdt)
    for k in range(9):
        dy, dx = divmod(k, 3)
        col2_ref[:, k * c2:(k + 1) * c2] = (
            pad2_ref[:, dy:dy + hp, dx:dx + wp, :].reshape(m, c2))
    acc2 = jnp.dot(col2_ref[...], w2_ref[...],
                   preferred_element_type=jnp.float32)         # (m, c2), K = 9*c2
    acc2 = acc2 + b2_ref[...]
    y2 = jnp.where(acc2 >= 0.0, acc2, slope * acc2)

    # TODO(synk): for very large nb*hp*wp blocks, additionally tile the GEMM M
    # dimension (fori_loop over row chunks) instead of one full-height dot.

    out_ref[...] = y2.astype(out_ref.dtype)                    # (m, c2), no relayout


# ----------------------------------------------------------------------------
# BatchNorm folding (exact, eval mode)
# ----------------------------------------------------------------------------
def _fold_bn_into_conv(w, b, gamma, beta, mean, var, eps=1e-5):
    """Fold eval-mode BatchNorm2d into a 3x3 Conv2d.

    w: (Cout, Cin, 3, 3) OIHW -> GEMM weights (9*Cin, Cout), bias (1, Cout)."""
    s = gamma / jnp.sqrt(var + eps)                            # (Cout,)
    w_eff = w * s[:, None, None, None]
    b_eff = (b - mean) * s + beta
    cout, cin = w.shape[0], w.shape[1]
    taps = jnp.transpose(w_eff, (2, 3, 1, 0)).reshape(9 * cin, cout)
    return taps, b_eff[None, :].astype(jnp.float32)


# ----------------------------------------------------------------------------
# VMEM-budget-aware batch-block selection
# ----------------------------------------------------------------------------
def _vmem_capacity_bytes():
    try:
        return int(pltpu.get_tpu_info().vmem_capacity_bytes)
    except Exception:
        return 64 * 1024 * 1024        # conservative: v7x per-TensorCore VMEM


def _padded_vmem_bytes(shape, dtype):
    """Approximate VMEM footprint of a buffer incl. (sublane, lane) tile padding."""
    itemsize = np.dtype(dtype).itemsize
    dims = list(shape)
    if len(dims) >= 1:
        dims[-1] = -(-dims[-1] // 128) * 128
    if len(dims) >= 2:
        sub = 8 * max(1, 4 // itemsize)                        # 8 (f32) / 16 (bf16)
        dims[-2] = -(-dims[-2] // sub) * sub
    n = 1
    for d in dims:
        n *= d
    return n * itemsize


def _step_vmem_bytes(nb, H, W, C1, C2, cdt):
    hp, wp = H // 2, W // 2
    m = nb * hp * wp
    total = 0
    total += 2 * _padded_vmem_bytes((nb, H, wp, 2 * C1), cdt)        # input block x2 (dbl buf)
    total += 2 * _padded_vmem_bytes((m, C2), jnp.float32)            # output block x2
    total += 2 * (_padded_vmem_bytes((9 * C1, C2), cdt)
                  + _padded_vmem_bytes((9 * C2, C2), cdt)
                  + 2 * _padded_vmem_bytes((1, C2), jnp.float32))    # weights / bias
    total += _padded_vmem_bytes((nb, hp + 2, wp + 2, C1), cdt)       # pad1
    total += _padded_vmem_bytes((m, 9 * C1), cdt)                    # im2col 1
    total += _padded_vmem_bytes((nb, hp + 2, wp + 2, C2), cdt)       # pad2
    total += _padded_vmem_bytes((m, 9 * C2), cdt)                    # im2col 2
    total += 4 * _padded_vmem_bytes((m, C2), jnp.float32)            # live GEMM results / temps
    total += 2 * _padded_vmem_bytes((nb, hp, wp, C1), jnp.float32)   # pooling temps
    return total


def _pick_batch_block(N, H, W, C1, C2, cdt, vmem_budget):
    """Largest batch block whose per-step working set fits the VMEM budget,
    keeping >= 2 grid steps (pipeline overlap + v7x two-TensorCore sharding)."""
    best = 1
    for nb in range(1, N + 1):
        if N % nb:
            continue
        if N > 1 and N // nb < 2:
            continue
        if _step_vmem_bytes(nb, H, W, C1, C2, cdt) <= vmem_budget:
            best = nb
    return best


# ----------------------------------------------------------------------------
# wrapper
# ----------------------------------------------------------------------------
def unet_down_pallas(x_nchw, params, *, slope=0.01, compute_dtype=jnp.bfloat16,
                     channels_last=False, eps=1e-5):
    """x_nchw: (N, C1, H, W) f32 -> (N, C2, H//2, W//2) f32 (or NHWC if channels_last)."""
    N, C1, H, W = x_nchw.shape
    if H % 2 or W % 2:
        raise ValueError("UnetDown Pallas kernel requires even H and W "
                         "(PyTorch MaxPool2d(2) floors odd spatial sizes).")
    hp, wp = H // 2, W // 2
    C2 = params["conv1_w"].shape[0]
    cdt = np.dtype(compute_dtype)

    # Fold eval-mode BatchNorm2d into the convs (exact) and lay the taps out as
    # (9*Cin, Cout) to match the in-kernel im2col K ordering.
    w1, b1 = _fold_bn_into_conv(params["conv1_w"], params["conv1_b"],
                                params["bn1_g"], params["bn1_b"],
                                params["bn1_m"], params["bn1_v"], eps)
    w2, b2 = _fold_bn_into_conv(params["conv2_w"], params["conv2_b"],
                                params["bn2_g"], params["bn2_b"],
                                params["bn2_m"], params["bn2_v"], eps)
    w1 = w1.astype(cdt)
    w2 = w2.astype(cdt)

    # Single wrapper-side layout op: NCHW -> NHWC.  The trailing reshape that
    # pairs the two W-neighbours of each 2x2 pooling window into the lane dim
    # is free (pure metadata on contiguous NHWC).  Max pooling commutes with
    # monotone rounding, so casting to bf16 here is exact w.r.t. pooling.
    x = jnp.transpose(x_nchw, (0, 2, 3, 1)).astype(cdt).reshape(N, H, wp, 2 * C1)

    vmem_cap = _vmem_capacity_bytes()
    nb = _pick_batch_block(N, H, W, C1, C2, cdt, vmem_budget=vmem_cap // 2)
    grid = (N // nb,)
    m = nb * hp * wp

    kernel = functools.partial(_unet_down_kernel, nb=nb, hp=hp, wp=wp,
                               c1=C1, c2=C2, slope=slope)

    flops = 2 * N * hp * wp * 9 * (C1 * C2 + C2 * C2)
    bytes_accessed = (x.size * x.dtype.itemsize
                      + N * hp * wp * C2 * 4
                      + int(w1.size + w2.size) * cdt.itemsize
                      + int(b1.size + b2.size) * 4)
    cost = pl.CostEstimate(flops=flops, transcendentals=0,
                           bytes_accessed=bytes_accessed)

    out2d = pl.pallas_call(
        kernel,
        out_shape=jax.ShapeDtypeStruct((N * hp * wp, C2), jnp.float32),
        grid=grid,
        in_specs=[
            pl.BlockSpec((nb, H, wp, 2 * C1), lambda b: (b, 0, 0, 0)),
            pl.BlockSpec((9 * C1, C2), lambda b: (0, 0)),
            pl.BlockSpec((1, C2), lambda b: (0, 0)),
            pl.BlockSpec((9 * C2, C2), lambda b: (0, 0)),
            pl.BlockSpec((1, C2), lambda b: (0, 0)),
        ],
        out_specs=pl.BlockSpec((m, C2), lambda b: (b, 0)),
        scratch_shapes=[
            pltpu.VMEM((nb, hp + 2, wp + 2, C1), cdt),   # padded input, conv1
            pltpu.VMEM((m, 9 * C1), cdt),                # im2col, conv1
            pltpu.VMEM((nb, hp + 2, wp + 2, C2), cdt),   # padded input, conv2
            pltpu.VMEM((m, 9 * C2), cdt),                # im2col, conv2
        ],
        compiler_params=pltpu.CompilerParams(
            dimension_semantics=("parallel",),
            vmem_limit_bytes=int(vmem_cap * 0.8)),
        cost_estimate=cost,
    )(x, w1, b1, w2, b2)

    out_nhwc = out2d.reshape(N, hp, wp, C2)
    if channels_last:
        return out_nhwc
    # TODO(synk): consumers that accept NHWC should pass channels_last=True and
    # skip this extra HBM round trip (separate XLA transpose).
    return jnp.transpose(out_nhwc, (0, 3, 1, 2))


# ----------------------------------------------------------------------------
# pure-JAX reference (explicit conv -> BN(eval) -> LeakyReLU), NCHW
# ----------------------------------------------------------------------------
def unet_down_ref(x, p, slope=0.01, eps=1e-5):
    n, c1, h, w = x.shape
    hp, wp = h // 2, w // 2
    xp = x.reshape(n, c1, hp, 2, wp, 2).max(axis=(3, 5))     # MaxPool2d(2)

    def conv_norm_act(h_in, w_, b_, g_, be_, m_, v_):
        y = jax.lax.conv_general_dilated(
            h_in, w_, window_strides=(1, 1), padding=((1, 1), (1, 1)),
            dimension_numbers=("NCHW", "OIHW", "NCHW"),
            precision=jax.lax.Precision.HIGHEST)
        y = y + b_[None, :, None, None]
        y = (y - m_[None, :, None, None]) * jax.lax.rsqrt(v_[None, :, None, None] + eps)
        y = y * g_[None, :, None, None] + be_[None, :, None, None]
        return jnp.where(y >= 0.0, y, slope * y)

    h1 = conv_norm_act(xp, p["conv1_w"], p["conv1_b"],
                       p["bn1_g"], p["bn1_b"], p["bn1_m"], p["bn1_v"])
    # Dropout: identity (eval mode)
    h2 = conv_norm_act(h1, p["conv2_w"], p["conv2_b"],
                       p["bn2_g"], p["bn2_b"], p["bn2_m"], p["bn2_v"])
    return h2


# ----------------------------------------------------------------------------
# deterministic parameter init (shapes follow the PyTorch __init__)
# ----------------------------------------------------------------------------
def init_params(key, c1, c2, scale=0.1):
    ks = jax.random.split(key, 12)
    p = {}
    p["conv1_w"] = jax.random.normal(ks[0], (c2, c1, 3, 3), jnp.float32) * scale
    p["conv1_b"] = jax.random.normal(ks[1], (c2,), jnp.float32) * scale
    p["bn1_g"] = 1.0 + 0.1 * jax.random.normal(ks[2], (c2,), jnp.float32)
    p["bn1_b"] = 0.1 * jax.random.normal(ks[3], (c2,), jnp.float32)
    p["bn1_m"] = 0.1 * jax.random.normal(ks[4], (c2,), jnp.float32)
    p["bn1_v"] = 1.0 + 0.2 * jax.random.uniform(ks[5], (c2,), jnp.float32)
    p["conv2_w"] = jax.random.normal(ks[6], (c2, c2, 3, 3), jnp.float32) * scale
    p["conv2_b"] = jax.random.normal(ks[7], (c2,), jnp.float32) * scale
    p["bn2_g"] = 1.0 + 0.1 * jax.random.normal(ks[8], (c2,), jnp.float32)
    p["bn2_b"] = 0.1 * jax.random.normal(ks[9], (c2,), jnp.float32)
    p["bn2_m"] = 0.1 * jax.random.normal(ks[10], (c2,), jnp.float32)
    p["bn2_v"] = 1.0 + 0.2 * jax.random.uniform(ks[11], (c2,), jnp.float32)
    return p


if __name__ == "__main__":
    # Small shapes consistent with the module: batch=2, c1=4, c2=8, spatial 16x16.
    N, C1, C2, H, W = 2, 4, 8, 16, 16

    key = jax.random.PRNGKey(0)
    kx, kp = jax.random.split(key)
    x = jax.random.normal(kx, (N, C1, H, W), jnp.float32)
    params = init_params(kp, C1, C2)

    ref = unet_down_ref(x, params)

    # Strict-parity path: f32 MXU operands.
    out_f32 = jax.block_until_ready(
        unet_down_pallas(x, params, compute_dtype=jnp.float32))
    assert out_f32.shape == (N, C2, H // 2, W // 2), out_f32.shape
    err32 = float(jnp.max(jnp.abs(out_f32 - ref)))
    if not bool(jnp.allclose(out_f32, ref, atol=2e-3, rtol=2e-3)):
        raise AssertionError(f"f32 kernel/reference mismatch, max abs err = {err32}")

    # Fast path (default): bf16 MXU operands, f32 accumulation.
    out_bf16 = jax.block_until_ready(unet_down_pallas(x, params))
    assert out_bf16.shape == (N, C2, H // 2, W // 2), out_bf16.shape
    errbf = float(jnp.max(jnp.abs(out_bf16 - ref)))
    if not bool(jnp.allclose(out_bf16, ref, atol=8e-2, rtol=8e-2)):
        raise AssertionError(f"bf16 kernel/reference mismatch, max abs err = {errbf}")

    print("KERNEL_OK")
</pallas_src>

<mosaic_0001>
module attributes {stable_mosaic.version = 11 : i64} {
  func.func @_unet_down_kernel(%arg0: i32, %arg1: memref<1x16x8x8xf32, #tpu.memory_space<vmem>>, %arg2: memref<36x8xf32, #tpu.memory_space<vmem>>, %arg3: memref<1x8xf32, #tpu.memory_space<vmem>>, %arg4: memref<72x8xf32, #tpu.memory_space<vmem>>, %arg5: memref<1x8xf32, #tpu.memory_space<vmem>>, %arg6: memref<64x8xf32, #tpu.memory_space<vmem>>, %arg7: memref<1x10x10x4xf32, #tpu.memory_space<vmem>>, %arg8: memref<64x36xf32, #tpu.memory_space<vmem>>, %arg9: memref<1x10x10x8xf32, #tpu.memory_space<vmem>>, %arg10: memref<64x72xf32, #tpu.memory_space<vmem>>) attributes {dimension_semantics = [#tpu.dimension_semantics<parallel>], iteration_bounds = array<i64: 2>, scalar_prefetch = 0 : i64, scratch_operands = 4 : i64, tpu.core_type = #tpu.core_type<tc>, window_params = [{transform_indices = @transform_0, window_bounds = array<i64: 1, 16, 8, 8>}, {pipeline_mode = #tpu.pipeline_mode<synchronous>, transform_indices = @transform_1, window_bounds = array<i64: 36, 8>}, {pipeline_mode = #tpu.pipeline_mode<synchronous>, transform_indices = @transform_2, window_bounds = array<i64: 1, 8>}, {pipeline_mode = #tpu.pipeline_mode<synchronous>, transform_indices = @transform_3, window_bounds = array<i64: 72, 8>}, {pipeline_mode = #tpu.pipeline_mode<synchronous>, transform_indices = @transform_4, window_bounds = array<i64: 1, 8>}, {transform_indices = @transform_5, window_bounds = array<i64: 64, 8>}]} {
    %c0 = arith.constant 0 : index
    %c0_0 = arith.constant 0 : index
    %c0_1 = arith.constant 0 : index
    %c0_2 = arith.constant 0 : index
    %0 = vector.load %arg1[%c0, %c0_0, %c0_1, %c0_2] : memref<1x16x8x8xf32, #tpu.memory_space<vmem>>, vector<1x16x8x8xf32>
    %1 = vector.extract_strided_slice %0 {offsets = [0, 0, 0, 0], sizes = [1, 16, 8, 4], strides = [1, 1, 1, 1]} : vector<1x16x8x8xf32> to vector<1x16x8x4xf32>
    %2 = vector.extract_strided_slice %0 {offsets = [0, 0, 0, 4], sizes = [1, 16, 8, 4], strides = [1, 1, 1, 1]} : vector<1x16x8x8xf32> to vector<1x16x8x4xf32>
    %3 = arith.maximumf %1, %2 : vector<1x16x8x4xf32>
    %4 = vector.shape_cast %3 : vector<1x16x8x4xf32> to vector<1x8x2x8x4xf32>
    %5 = vector.extract_strided_slice %4 {offsets = [0, 0, 0, 0, 0], sizes = [1, 8, 1, 8, 4], strides = [1, 1, 1, 1, 1]} : vector<1x8x2x8x4xf32> to vector<1x8x1x8x4xf32>
    %6 = vector.shape_cast %5 : vector<1x8x1x8x4xf32> to vector<1x8x8x4xf32>
    %7 = vector.extract_strided_slice %4 {offsets = [0, 0, 1, 0, 0], sizes = [1, 8, 1, 8, 4], strides = [1, 1, 1, 1, 1]} : vector<1x8x2x8x4xf32> to vector<1x8x1x8x4xf32>
    %8 = vector.shape_cast %7 : vector<1x8x1x8x4xf32> to vector<1x8x8x4xf32>
    %9 = arith.maximumf %6, %8 : vector<1x8x8x4xf32>
    %cst = arith.constant 0.000000e+00 : f32
    %10 = vector.broadcast %cst : f32 to vector<1x1x10x4xf32>
    %cst_3 = arith.constant 0.000000e+00 : f32
    %11 = vector.broadcast %cst_3 : f32 to vector<1x8x1x4xf32>
    %c0_4 = arith.constant 0 : index
    %c0_5 = arith.constant 0 : index
    %c0_6 = arith.constant 0 : index
    %c0_7 = arith.constant 0 : index
    %12 = vector.load %arg7[%c0_4, %c0_5, %c0_6, %c0_7] : memref<1x10x10x4xf32, #tpu.memory_space<vmem>>, vector<1x1x10x4xf32>
    tpu.vector_store %arg7[%c0_4, %c0_5, %c0_6, %c0_7], %10 {strides = array<i32>} : memref<1x10x10x4xf32, #tpu.memory_space<vmem>>, vector<1x1x10x4xf32>,
    %c0_8 = arith.constant 0 : index
    %c9 = arith.constant 9 : index
    %c0_9 = arith.constant 0 : index
    %c0_10 = arith.constant 0 : index
    %13 = vector.load %arg7[%c0_8, %c9, %c0_9, %c0_10] : memref<1x10x10x4xf32, #tpu.memory_space<vmem>>, vector<1x1x10x4xf32>
    tpu.vector_store %arg7[%c0_8, %c9, %c0_9, %c0_10], %10 {strides = array<i32>} : memref<1x10x10x4xf32, #tpu.memory_space<vmem>>, vector<1x1x10x4xf32>,
    %c0_11 = arith.constant 0 : index
    %c1 = arith.constant 1 : index
    %c0_12 = arith.constant 0 : index
    %c0_13 = arith.constant 0 : index
    %14 = vector.load %arg7[%c0_11, %c1, %c0_12, %c0_13] : memref<1x10x10x4xf32, #tpu.memory_space<vmem>>, vector<1x8x1x4xf32>
    tpu.vector_store %arg7[%c0_11, %c1, %c0_12, %c0_13], %11 {strides = array<i32>} : memref<1x10x10x4xf32, #tpu.memory_space<vmem>>, vector<1x8x1x4xf32>,
    %c0_14 = arith.constant 0 : index
    %c1_15 = arith.constant 1 : index
    %c9_16 = arith.constant 9 : index
    %c0_17 = arith.constant 0 : index
    %15 = vector.load %arg7[%c0_14, %c1_15, %c9_16, %c0_17] : memref<1x10x10x4xf32, #tpu.memory_space<vmem>>, vector<1x8x1x4xf32>
    tpu.vector_store %arg7[%c0_14, %c1_15, %c9_16, %c0_17], %11 {strides = array<i32>} : memref<1x10x10x4xf32, #tpu.memory_space<vmem>>, vector<1x8x1x4xf32>,
    %c0_18 = arith.constant 0 : index
    %c1_19 = arith.constant 1 : index
    %c1_20 = arith.constant 1 : index
    %c0_21 = arith.constant 0 : index
    %16 = vector.load %arg7[%c0_18, %c1_19, %c1_20, %c0_21] : memref<1x10x10x4xf32, #tpu.memory_space<vmem>>, vector<1x8x8x4xf32>
    tpu.vector_store %arg7[%c0_18, %c1_19, %c1_20, %c0_21], %9 {strides = array<i32>} : memref<1x10x10x4xf32, #tpu.memory_space<vmem>>, vector<1x8x8x4xf32>,
    %c0_22 = arith.constant 0 : index
    %c0_23 = arith.constant 0 : index
    %c0_24 = arith.constant 0 : index
    %c0_25 = arith.constant 0 : index
    %17 = vector.load %arg7[%c0_22, %c0_23, %c0_24, %c0_25] : memref<1x10x10x4xf32, #tpu.memory_space<vmem>>, vector<1x8x8x4xf32>
    %18 = vector.shape_cast %17 : vector<1x8x8x4xf32> to vector<64x4xf32>
    %c0_26 = arith.constant 0 : index
    %c0_27 = arith.constant 0 : index
    %19 = vector.load %arg8[%c0_26, %c0_27] : memref<64x36xf32, #tpu.memory_space<vmem>>, vector<64x4xf32>
    tpu.vector_store %arg8[%c0_26, %c0_27], %18 {strides = array<i32>} : memref<64x36xf32, #tpu.memory_space<vmem>>, vector<64x4xf32>,
    %c0_28 = arith.constant 0 : index
    %c0_29 = arith.constant 0 : index
    %c1_30 = arith.constant 1 : index
    %c0_31 = arith.constant 0 : index
    %20 = vector.load %arg7[%c0_28, %c0_29, %c1_30, %c0_31] : memref<1x10x10x4xf32, #tpu.memory_space<vmem>>, vector<1x8x8x4xf32>
    %21 = vector.shape_cast %20 : vector<1x8x8x4xf32> to vector<64x4xf32>
    %c0_32 = arith.constant 0 : index
    %c4 = arith.constant 4 : index
    %22 = vector.load %arg8[%c0_32, %c4] : memref<64x36xf32, #tpu.memory_space<vmem>>, vector<64x4xf32>
    tpu.vector_store %arg8[%c0_32, %c4], %21 {strides = array<i32>} : memref<64x36xf32, #tpu.memory_space<vmem>>, vector<64x4xf32>,
    %c0_33 = arith.constant 0 : index
    %c0_34 = arith.constant 0 : index
    %c2 = arith.constant 2 : index
    %c0_35 = arith.constant 0 : index
    %23 = vector.load %arg7[%c0_33, %c0_34, %c2, %c0_35] : memref<1x10x10x4xf32, #tpu.memory_space<vmem>>, vector<1x8x8x4xf32>
    %24 = vector.shape_cast %23 : vector<1x8x8x4xf32> to vector<64x4xf32>
    %c0_36 = arith.constant 0 : index
    %c8 = arith.constant 8 : index
    %25 = vector.load %arg8[%c0_36, %c8] : memref<64x36xf32, #tpu.memory_space<vmem>>, vector<64x4xf32>
    tpu.vector_store %arg8[%c0_36, %c8], %24 {strides = array<i32>} : memref<64x36xf32, #tpu.memory_space<vmem>>, vector<64x4xf32>,
    %c0_37 = arith.constant 0 : index
    %c1_38 = arith.constant 1 : index
    %c0_39 = arith.constant 0 : index
    %c0_40 = arith.constant 0 : index
    %26 = vector.load %arg7[%c0_37, %c1_38, %c0_39, %c0_40] : memref<1x10x10x4xf32, #tpu.memory_space<vmem>>, vector<1x8x8x4xf32>
    %27 = vector.shape_cast %26 : vector<1x8x8x4xf32> to vector<64x4xf32>
    %c0_41 = arith.constant 0 : index
    %c12 = arith.constant 12 : index
    %28 = vector.load %arg8[%c0_41, %c12] : memref<64x36xf32, #tpu.memory_space<vmem>>, vector<64x4xf32>
    tpu.vector_store %arg8[%c0_41, %c12], %27 {strides = array<i32>} : memref<64x36xf32, #tpu.memory_space<vmem>>, vector<64x4xf32>,
    %c0_42 = arith.constant 0 : index
    %c1_43 = arith.constant 1 : index
    %c1_44 = arith.constant 1 : index
    %c0_45 = arith.constant 0 : index
    %29 = vector.load %arg7[%c0_42, %c1_43, %c1_44, %c0_45] : memref<1x10x10x4xf32, #tpu.memory_space<vmem>>, vector<1x8x8x4xf32>
    %30 = vector.shape_cast %29 : vector<1x8x8x4xf32> to vector<64x4xf32>
    %c0_46 = arith.constant 0 : index
    %c16 = arith.constant 16 : index
    %31 = vector.load %arg8[%c0_46, %c16] : memref<64x36xf32, #tpu.memory_space<vmem>>, vector<64x4xf32>
    tpu.vector_store %arg8[%c0_46, %c16], %30 {strides = array<i32>} : memref<64x36xf32, #tpu.memory_space<vmem>>, vector<64x4xf32>,
    %c0_47 = arith.constant 0 : index
    %c1_48 = arith.constant 1 : index
    %c2_49 = arith.constant 2 : index
    %c0_50 = arith.constant 0 : index
    %32 = vector.load %arg7[%c0_47, %c1_48, %c2_49, %c0_50] : memref<1x10x10x4xf32, #tpu.memory_space<vmem>>, vector<1x8x8x4xf32>
    %33 = vector.shape_cast %32 : vector<1x8x8x4xf32> to vector<64x4xf32>
    %c0_51 = arith.constant 0 : index
    %c20 = arith.constant 20 : index
    %34 = vector.load %arg8[%c0_51, %c20] : memref<64x36xf32, #tpu.memory_space<vmem>>, vector<64x4xf32>
    tpu.vector_store %arg8[%c0_51, %c20], %33 {strides = array<i32>} : memref<64x36xf32, #tpu.memory_space<vmem>>, vector<64x4xf32>,
    %c0_52 = arith.constant 0 : index
    %c2_53 = arith.constant 2 : index
    %c0_54 = arith.constant 0 : index
    %c0_55 = arith.constant 0 : index
    %35 = vector.load %arg7[%c0_52, %c2_53, %c0_54, %c0_55] : memref<1x10x10x4xf32, #tpu.memory_space<vmem>>, vector<1x8x8x4xf32>
    %36 = vector.shape_cast %35 : vector<1x8x8x4xf32> to vector<64x4xf32>
    %c0_56 = arith.constant 0 : index
    %c24 = arith.constant 24 : index
    %37 = vector.load %arg8[%c0_56, %c24] : memref<64x36xf32, #tpu.memory_space<vmem>>, vector<64x4xf32>
    tpu.vector_store %arg8[%c0_56, %c24], %36 {strides = array<i32>} : memref<64x36xf32, #tpu.memory_space<vmem>>, vector<64x4xf32>,
    %c0_57 = arith.constant 0 : index
    %c2_58 = arith.constant 2 : index
    %c1_59 = arith.constant 1 : index
    %c0_60 = arith.constant 0 : index
    %38 = vector.load %arg7[%c0_57, %c2_58, %c1_59, %c0_60] : memref<1x10x10x4xf32, #tpu.memory_space<vmem>>, vector<1x8x8x4xf32>
    %39 = vector.shape_cast %38 : vector<1x8x8x4xf32> to vector<64x4xf32>
    %c0_61 = arith.constant 0 : index
    %c28 = arith.constant 28 : index
    %40 = vector.load %arg8[%c0_61, %c28] : memref<64x36xf32, #tpu.memory_space<vmem>>, vector<64x4xf32>
    tpu.vector_store %arg8[%c0_61, %c28], %39 {strides = array<i32>} : memref<64x36xf32, #tpu.memory_space<vmem>>, vector<64x4xf32>,
    %c0_62 = arith.constant 0 : index
    %c2_63 = arith.constant 2 : index
    %c2_64 = arith.constant 2 : index
    %c0_65 = arith.constant 0 : index
    %41 = vector.load %arg7[%c0_62, %c2_63, %c2_64, %c0_65] : memref<1x10x10x4xf32, #tpu.memory_space<vmem>>, vector<1x8x8x4xf32>
    %42 = vector.shape_cast %41 : vector<1x8x8x4xf32> to vector<64x4xf32>
    %c0_66 = arith.constant 0 : index
    %c32 = arith.constant 32 : index
    %43 = vector.load %arg8[%c0_66, %c32] : memref<64x36xf32, #tpu.memory_space<vmem>>, vector<64x4xf32>
    tpu.vector_store %arg8[%c0_66, %c32], %42 {strides = array<i32>} : memref<64x36xf32, #tpu.memory_space<vmem>>, vector<64x4xf32>,
    %c0_67 = arith.constant 0 : index
    %c0_68 = arith.constant 0 : index
    %44 = vector.load %arg8[%c0_67, %c0_68] : memref<64x36xf32, #tpu.memory_space<vmem>>, vector<64x36xf32>
    %c0_69 = arith.constant 0 : index
    %c0_70 = arith.constant 0 : index
    %45 = vector.load %arg2[%c0_69, %c0_70] : memref<36x8xf32, #tpu.memory_space<vmem>>, vector<36x8xf32>
    %cst_71 = arith.constant dense<0.000000e+00> : vector<64x8xf32>
    %46 = tpu.matmul %44, %45, %cst_71 {dimension_numbers = #tpu.dot_dimension_numbers<[1], [0], [0], [1], [0, 0, 1, 1], [], []>} : vector<64x36xf32>, vector<36x8xf32>, vector<64x8xf32> -> vector<64x8xf32>
    %c0_72 = arith.constant 0 : index
    %c0_73 = arith.constant 0 : index
    %47 = vector.load %arg3[%c0_72, %c0_73] : memref<1x8xf32, #tpu.memory_space<vmem>>, vector<1x8xf32>
    %48 = vector.broadcast %47 : vector<1x8xf32> to vector<64x8xf32>
    %49 = arith.addf %46, %48 : vector<64x8xf32>
    %cst_74 = arith.constant 0.000000e+00 : f32
    %50 = vector.broadcast %cst_74 : f32 to vector<64x8xf32>
    %51 = arith.cmpf oge, %49, %50 : vector<64x8xf32>
    %cst_75 = arith.constant 0.00999999977 : f32
    %52 = vector.broadcast %cst_75 : f32 to vector<64x8xf32>
    %53 = arith.mulf %52, %49 : vector<64x8xf32>
    %54 = arith.select %51, %49, %53 : vector<64x8xi1>, vector<64x8xf32>
    %cst_76 = arith.constant 0.000000e+00 : f32
    %55 = vector.broadcast %cst_76 : f32 to vector<1x1x10x8xf32>
    %cst_77 = arith.constant 0.000000e+00 : f32
    %56 = vector.broadcast %cst_77 : f32 to vector<1x8x1x8xf32>
    %c0_78 = arith.constant 0 : index
    %c0_79 = arith.constant 0 : index
    %c0_80 = arith.constant 0 : index
    %c0_81 = arith.constant 0 : index
    %57 = vector.load %arg9[%c0_78, %c0_79, %c0_80, %c0_81] : memref<1x10x10x8xf32, #tpu.memory_space<vmem>>, vector<1x1x10x8xf32>
    tpu.vector_store %arg9[%c0_78, %c0_79, %c0_80, %c0_81], %55 {strides = array<i32>} : memref<1x10x10x8xf32, #tpu.memory_space<vmem>>, vector<1x1x10x8xf32>,
    %c0_82 = arith.constant 0 : index
    %c9_83 = arith.constant 9 : index
    %c0_84 = arith.constant 0 : index
    %c0_85 = arith.constant 0 : index
    %58 = vector.load %arg9[%c0_82, %c9_83, %c0_84, %c0_85] : memref<1x10x10x8xf32, #tpu.memory_space<vmem>>, vector<1x1x10x8xf32>
    tpu.vector_store %arg9[%c0_82, %c9_83, %c0_84, %c0_85], %55 {strides = array<i32>} : memref<1x10x10x8xf32, #tpu.memory_space<vmem>>, vector<1x1x10x8xf32>,
    %c0_86 = arith.constant 0 : index
    %c1_87 = arith.constant 1 : index
    %c0_88 = arith.constant 0 : index
    %c0_89 = arith.constant 0 : index
    %59 = vector.load %arg9[%c0_86, %c1_87, %c0_88, %c0_89] : memref<1x10x10x8xf32, #tpu.memory_space<vmem>>, vector<1x8x1x8xf32>
    tpu.vector_store %arg9[%c0_86, %c1_87, %c0_88, %c0_89], %56 {strides = array<i32>} : memref<1x10x10x8xf32, #tpu.memory_space<vmem>>, vector<1x8x1x8xf32>,
    %c0_90 = arith.constant 0 : index
    %c1_91 = arith.constant 1 : index
    %c9_92 = arith.constant 9 : index
    %c0_93 = arith.constant 0 : index
    %60 = vector.load %arg9[%c0_90, %c1_91, %c9_92, %c0_93] : memref<1x10x10x8xf32, #tpu.memory_space<vmem>>, vector<1x8x1x8xf32>
    tpu.vector_store %arg9[%c0_90, %c1_91, %c9_92, %c0_93], %56 {strides = array<i32>} : memref<1x10x10x8xf32, #tpu.memory_space<vmem>>, vector<1x8x1x8xf32>,
    %61 = vector.shape_cast %54 : vector<64x8xf32> to vector<1x8x8x8xf32>
    %c0_94 = arith.constant 0 : index
    %c1_95 = arith.constant 1 : index
    %c1_96 = arith.constant 1 : index
    %c0_97 = arith.constant 0 : index
    %62 = vector.load %arg9[%c0_94, %c1_95, %c1_96, %c0_97] : memref<1x10x10x8xf32, #tpu.memory_space<vmem>>, vector<1x8x8x8xf32>
    tpu.vector_store %arg9[%c0_94, %c1_95, %c1_96, %c0_97], %61 {strides = array<i32>} : memref<1x10x10x8xf32, #tpu.memory_space<vmem>>, vector<1x8x8x8xf32>,
    %c0_98 = arith.constant 0 : index
    %c0_99 = arith.constant 0 : index
    %c0_100 = arith.constant 0 : index
    %c0_101 = arith.constant 0 : index
    %63 = vector.load %arg9[%c0_98, %c0_99, %c0_100, %c0_101] : memref<1x10x10x8xf32, #tpu.memory_space<vmem>>, vector<1x8x8x8xf32>
    %64 = vector.shape_cast %63 : vector<1x8x8x8xf32> to vector<64x8xf32>
    %c0_102 = arith.constant 0 : index
    %c0_103 = arith.constant 0 : index
    %65 = vector.load %arg10[%c0_102, %c0_103] : memref<64x72xf32, #tpu.memory_space<vmem>>, vector<64x8xf32>
    tpu.vector_store %arg10[%c0_102, %c0_103], %64 {strides = array<i32>} : memref<64x72xf32, #tpu.memory_space<vmem>>, vector<64x8xf32>,
    %c0_104 = arith.constant 0 : index
    %c0_105 = arith.constant 0 : index
    %c1_106 = arith.constant 1 : index
    %c0_107 = arith.constant 0 : index
    %66 = vector.load %arg9[%c0_104, %c0_105, %c1_106, %c0_107] : memref<1x10x10x8xf32, #tpu.memory_space<vmem>>, vector<1x8x8x8xf32>
    %67 = vector.shape_cast %66 : vector<1x8x8x8xf32> to vector<64x8xf32>
    %c0_108 = arith.constant 0 : index
    %c8_109 = arith.constant 8 : index
    %68 = vector.load %arg10[%c0_108, %c8_109] : memref<64x72xf32, #tpu.memory_space<vmem>>, vector<64x8xf32>
    tpu.vector_store %arg10[%c0_108, %c8_109], %67 {strides = array<i32>} : memref<64x72xf32, #tpu.memory_space<vmem>>, vector<64x8xf32>,
    %c0_110 = arith.constant 0 : index
    %c0_111 = arith.constant 0 : index
    %c2_112 = arith.constant 2 : index
    %c0_113 = arith.constant 0 : index
    %69 = vector.load %arg9[%c0_110, %c0_111, %c2_112, %c0_113] : memref<1x10x10x8xf32, #tpu.memory_space<vmem>>, vector<1x8x8x8xf32>
    %70 = vector.shape_cast %69 : vector<1x8x8x8xf32> to vector<64x8xf32>
    %c0_114 = arith.constant 0 : index
    %c16_115 = arith.constant 16 : index
    %71 = vector.load %arg10[%c0_114, %c16_115] : memref<64x72xf32, #tpu.memory_space<vmem>>, vector<64x8xf32>
    tpu.vector_store %arg10[%c0_114, %c16_115], %70 {strides = array<i32>} : memref<64x72xf32, #tpu.memory_space<vmem>>, vector<64x8xf32>,
    %c0_116 = arith.constant 0 : index
    %c1_117 = arith.constant 1 : index
    %c0_118 = arith.constant 0 : index
    %c0_119 = arith.constant 0 : index
    %72 = vector.load %arg9[%c0_116, %c1_117, %c0_118, %c0_119] : memref<1x10x10x8xf32, #tpu.memory_space<vmem>>, vector<1x8x8x8xf32>
    %73 = vector.shape_cast %72 : vector<1x8x8x8xf32> to vector<64x8xf32>
    %c0_120 = arith.constant 0 : index
    %c24_121 = arith.constant 24 : index
    %74 = vector.load %arg10[%c0_120, %c24_121] : memref<64x72xf32, #tpu.memory_space<vmem>>, vector<64x8xf32>
    tpu.vector_store %arg10[%c0_120, %c24_121], %73 {strides = array<i32>} : memref<64x72xf32, #tpu.memory_space<vmem>>, vector<64x8xf32>,
    %c0_122 = arith.constant 0 : index
    %c1_123 = arith.constant 1 : index
    %c1_124 = arith.constant 1 : index
    %c0_125 = arith.constant 0 : index
    %75 = vector.load %arg9[%c0_122, %c1_123, %c1_124, %c0_125] : memref<1x10x10x8xf32, #tpu.memory_space<vmem>>, vector<1x8x8x8xf32>
    %76 = vector.shape_cast %75 : vector<1x8x8x8xf32> to vector<64x8xf32>
    %c0_126 = arith.constant 0 : index
    %c32_127 = arith.constant 32 : index
    %77 = vector.load %arg10[%c0_126, %c32_127] : memref<64x72xf32, #tpu.memory_space<vmem>>, vector<64x8xf32>
    tpu.vector_store %arg10[%c0_126, %c32_127], %76 {strides = array<i32>} : memref<64x72xf32, #tpu.memory_space<vmem>>, vector<64x8xf32>,
    %c0_128 = arith.constant 0 : index
    %c1_129 = arith.constant 1 : index
    %c2_130 = arith.constant 2 : index
    %c0_131 = arith.constant 0 : index
    %78 = vector.load %arg9[%c0_128, %c1_129, %c2_130, %c0_131] : memref<1x10x10x8xf32, #tpu.memory_space<vmem>>, vector<1x8x8x8xf32>
    %79 = vector.shape_cast %78 : vector<1x8x8x8xf32> to vector<64x8xf32>
    %c0_132 = arith.constant 0 : index
    %c40 = arith.constant 40 : index
    %80 = vector.load %arg10[%c0_132, %c40] : memref<64x72xf32, #tpu.memory_space<vmem>>, vector<64x8xf32>
    tpu.vector_store %arg10[%c0_132, %c40], %79 {strides = array<i32>} : memref<64x72xf32, #tpu.memory_space<vmem>>, vector<64x8xf32>,
    %c0_133 = arith.constant 0 : index
    %c2_134 = arith.constant 2 : index
    %c0_135 = arith.constant 0 : index
    %c0_136 = arith.constant 0 : index
    %81 = vector.load %arg9[%c0_133, %c2_134, %c0_135, %c0_136] : memref<1x10x10x8xf32, #tpu.memory_space<vmem>>, vector<1x8x8x8xf32>
    %82 = vector.shape_cast %81 : vector<1x8x8x8xf32> to vector<64x8xf32>
    %c0_137 = arith.constant 0 : index
    %c48 = arith.constant 48 : index
    %83 = vector.load %arg10[%c0_137, %c48] : memref<64x72xf32, #tpu.memory_space<vmem>>, vector<64x8xf32>
    tpu.vector_store %arg10[%c0_137, %c48], %82 {strides = array<i32>} : memref<64x72xf32, #tpu.memory_space<vmem>>, vector<64x8xf32>,
    %c0_138 = arith.constant 0 : index
    %c2_139 = arith.constant 2 : index
    %c1_140 = arith.constant 1 : index
    %c0_141 = arith.constant 0 : index
    %84 = vector.load %arg9[%c0_138, %c2_139, %c1_140, %c0_141] : memref<1x10x10x8xf32, #tpu.memory_space<vmem>>, vector<1x8x8x8xf32>
    %85 = vector.shape_cast %84 : vector<1x8x8x8xf32> to vector<64x8xf32>
    %c0_142 = arith.constant 0 : index
    %c56 = arith.constant 56 : index
    %86 = vector.load %arg10[%c0_142, %c56] : memref<64x72xf32, #tpu.memory_space<vmem>>, vector<64x8xf32>
    tpu.vector_store %arg10[%c0_142, %c56], %85 {strides = array<i32>} : memref<64x72xf32, #tpu.memory_space<vmem>>, vector<64x8xf32>,
    %c0_143 = arith.constant 0 : index
    %c2_144 = arith.constant 2 : index
    %c2_145 = arith.constant 2 : index
    %c0_146 = arith.constant 0 : index
    %87 = vector.load %arg9[%c0_143, %c2_144, %c2_145, %c0_146] : memref<1x10x10x8xf32, #tpu.memory_space<vmem>>, vector<1x8x8x8xf32>
    %88 = vector.shape_cast %87 : vector<1x8x8x8xf32> to vector<64x8xf32>
    %c0_147 = arith.constant 0 : index
    %c64 = arith.constant 64 : index
    %89 = vector.load %arg10[%c0_147, %c64] : memref<64x72xf32, #tpu.memory_space<vmem>>, vector<64x8xf32>
    tpu.vector_store %arg10[%c0_147, %c64], %88 {strides = array<i32>} : memref<64x72xf32, #tpu.memory_space<vmem>>, vector<64x8xf32>,
    %c0_148 = arith.constant 0 : index
    %c0_149 = arith.constant 0 : index
    %90 = vector.load %arg10[%c0_148, %c0_149] : memref<64x72xf32, #tpu.memory_space<vmem>>, vector<64x72xf32>
    %c0_150 = arith.constant 0 : index
    %c0_151 = arith.constant 0 : index
    %91 = vector.load %arg4[%c0_150, %c0_151] : memref<72x8xf32, #tpu.memory_space<vmem>>, vector<72x8xf32>
    %cst_152 = arith.constant dense<0.000000e+00> : vector<64x8xf32>
    %92 = tpu.matmul %90, %91, %cst_152 {dimension_numbers = #tpu.dot_dimension_numbers<[1], [0], [0], [1], [0, 0, 1, 1], [], []>} : vector<64x72xf32>, vector<72x8xf32>, vector<64x8xf32> -> vector<64x8xf32>
    %c0_153 = arith.constant 0 : index
    %c0_154 = arith.constant 0 : index
    %93 = vector.load %arg5[%c0_153, %c0_154] : memref<1x8xf32, #tpu.memory_space<vmem>>, vector<1x8xf32>
    %94 = vector.broadcast %93 : vector<1x8xf32> to vector<64x8xf32>
    %95 = arith.addf %92, %94 : vector<64x8xf32>
    %cst_155 = arith.constant 0.000000e+00 : f32
    %96 = vector.broadcast %cst_155 : f32 to vector<64x8xf32>
    %97 = arith.cmpf oge, %95, %96 : vector<64x8xf32>
    %cst_156 = arith.constant 0.00999999977 : f32
    %98 = vector.broadcast %cst_156 : f32 to vector<64x8xf32>
    %99 = arith.mulf %98, %95 : vector<64x8xf32>
    %100 = arith.select %97, %95, %99 : vector<64x8xi1>, vector<64x8xf32>
    %c0_157 = arith.constant 0 : index
    %c0_158 = arith.constant 0 : index
    %101 = vector.load %arg6[%c0_157, %c0_158] : memref<64x8xf32, #tpu.memory_space<vmem>>, vector<64x8xf32>
    tpu.vector_store %arg6[%c0_157, %c0_158], %100 {strides = array<i32>} : memref<64x8xf32, #tpu.memory_space<vmem>>, vector<64x8xf32>,
    return
  }
  func.func @transform_0(%arg0: i32) -> (i32, i32, i32, i32) {
    %c0_i32 = arith.constant 0 : i32
    %c0_i32_0 = arith.constant 0 : i32
    %c0_i32_1 = arith.constant 0 : i32
    %c0_i32_2 = arith.constant 0 : i32
    return %arg0, %c0_i32, %c0_i32_0, %c0_i32_1 : i32, i32, i32, i32
  }
  func.func @transform_1(%arg0: i32) -> (i32, i32) {
    %c0_i32 = arith.constant 0 : i32
    %c0_i32_0 = arith.constant 0 : i32
    %c0_i32_1 = arith.constant 0 : i32
    return %c0_i32, %c0_i32_0 : i32, i32
  }
  func.func @transform_2(%arg0: i32) -> (i32, i32) {
    %c0_i32 = arith.constant 0 : i32
    %c0_i32_0 = arith.constant 0 : i32
    %c0_i32_1 = arith.constant 0 : i32
    return %c0_i32, %c0_i32_0 : i32, i32
  }
  func.func @transform_3(%arg0: i32) -> (i32, i32) {
    %c0_i32 = arith.constant 0 : i32
    %c0_i32_0 = arith.constant 0 : i32
    %c0_i32_1 = arith.constant 0 : i32
    return %c0_i32, %c0_i32_0 : i32, i32
  }
  func.func @transform_4(%arg0: i32) -> (i32, i32) {
    %c0_i32 = arith.constant 0 : i32
    %c0_i32_0 = arith.constant 0 : i32
    %c0_i32_1 = arith.constant 0 : i32
    return %c0_i32, %c0_i32_0 : i32, i32
  }
  func.func @transform_5(%arg0: i32) -> (i32, i32) {
    %c0_i32 = arith.constant 0 : i32
    %c0_i32_0 = arith.constant 0 : i32
    return %arg0, %c0_i32 : i32, i32
  }
}

</mosaic_0001>

<llo_original>
// kernel: tpu_custom_call.1
$region0: #{tpu_custom_call.1}
  #allocation0 [shape = 'u32[]', space=smem, size = 0x4, offset = 0x4, fixed_abs, tag = 'smem constant byte address 0x4 - core index']
  #allocation1 [shape = 'u32[144,128]{1,0:T(1,128)}', space=vmem, size = 0x12000, scoped, tag = 'internal scratch']
  #allocation2 [shape = 'f32[1,10,10,4]{3,2,1,0:T(8,128)}', space=vmem, size = 0x14000, scoped, tag = 'scratch operand']
  #allocation3 [shape = 'f32[64,36]{1,0:T(8,128)}', space=vmem, size = 0x8000, scoped, tag = 'scratch operand']
  #allocation4 [shape = 'f32[1,10,10,8]{3,2,1,0:T(8,128)}', space=vmem, size = 0x14000, scoped, tag = 'scratch operand']
  #allocation5 [shape = 'f32[64,72]{1,0:T(8,128)}', space=vmem, size = 0x8000, scoped, tag = 'scratch operand']
  %s0 = inlined_call_operand.vmem [shape: f32[2,16,8,8], index: 0, kind: input, shape index: {}]
  %s1 = inlined_call_operand.vmem [shape: f32[36,8], index: 1, kind: input, shape index: {}]
  %s2 = inlined_call_operand.vmem [shape: f32[1,8], index: 2, kind: input, shape index: {}]
  %s3 = inlined_call_operand.vmem [shape: f32[72,8], index: 3, kind: input, shape index: {}]
  %s4 = inlined_call_operand.vmem [shape: f32[1,8], index: 4, kind: input, shape index: {}]
  %s5 = inlined_call_operand.vmem [shape: f32[128,8], index: 5, kind: output, shape index: {}]
  %s6 = sld [smem:[#allocation0]]
  $region53: #{tpu_custom_call.1} parent=0
    _
  %s8 = ssub.s32 1, %s6
  %s9 = scalar_select 0, %s8, %s6
  loop: start=0, step=1, limit=4
  $region2: #{tpu_custom_call.1} parent=0 // loop_pre_header
    _
  $region3: #{tpu_custom_call.1} parent=0 // loop_header
    %s11 = sphi 0, %s15
    %p12 = scmp.ge.s32.totalorder %s11, 4
    %s21 = sphi 0, %s23
    %s24 = sphi 0, %s21
    %s25 = sphi 0, %s24
    %s41 = sphi 0, %s25
    %s45 = sphi 0, %s45
    %s47 = sphi 0, %s45
    %s48 = sphi 0, %s47
    %s62 = sphi 0, %s48
    %s66 = sphi 0, %s66
    %s68 = sphi 0, %s66
    %s69 = sphi 0, %s68
    %s83 = sphi 0, %s69
    %s87 = sphi 0, %s87
    %s89 = sphi 0, %s87
    %s90 = sphi 0, %s89
    %s104 = sphi 0, %s90
    %s108 = sphi 0, %s108
    %s110 = sphi 0, %s108
    %s111 = sphi 0, %s110
    %s125 = sphi 0, %s111
    %s131 = sphi 0, %s133
    %s134 = sphi 0, %s131
    %s135 = sphi 0, %s134
    %s151 = sphi 0, %s135
  $region4: #{tpu_custom_call.1} parent=0 // loop_header_branch
    %14 = sbr.rel (%p12) target = $region8
  $region5: #{tpu_custom_call.1} parent=0 // loop_body
    %s16 = ssub.s32 %s11, 1
    %s17 = ssub.s32 %s11, 2
    %s18 = sadd.s32 %s11, 1
    %s19 = ssub.s32 %s11, %s18
    %p20 = scmp.eq.s32.totalorder %s19, 0
    %s22 = sadd.s32 %s21, 1
    %s23 = scalar_select %p20, %s21, %s22
    %p26 = pneg %p20
    %p27 = scmp.eq.s32.totalorder %s11, 1
    %p28 = por %p26, %p27
    %p29 = scmp.ne.s32.totalorder %s21, %s24
    %p30 = scmp.eq.s32.totalorder %s11, 0
    %p31 = por %p29, %p30
    %p32 = scmp.ne.s32.totalorder %s21, %s24
    %p33 = scmp.eq.s32.totalorder %s16, 1
    %p34 = por %p32, %p33
    %p35 = scmp.ne.s32.totalorder %s24, %s25
    %p36 = scmp.eq.s32.totalorder %s16, 0
    %p37 = por %p35, %p36
    %p38 = scmp.ne.s32.totalorder %s24, %s25
    %p39 = scmp.eq.s32.totalorder %s17, 1
    %p40 = por %p38, %p39
    %p42 = scmp.ne.s32.totalorder %s25, %s41
    %p43 = scmp.eq.s32.totalorder %s17, 0
    %p44 = por %p42, %p43
    %s46 = sadd.s32 %s45, 1
    %p49 = scmp.eq.s32.totalorder %s11, 1
    %p50 = scmp.ne.s32.totalorder %s45, %s47
    %p51 = scmp.eq.s32.totalorder %s11, 0
    %p52 = por %p50, %p51
    %p53 = scmp.ne.s32.totalorder %s45, %s47
    %p54 = scmp.eq.s32.totalorder %s16, 1
    %p55 = por %p53, %p54
    %p56 = scmp.ne.s32.totalorder %s47, %s48
    %p57 = scmp.eq.s32.totalorder %s16, 0
    %p58 = por %p56, %p57
    %p59 = scmp.ne.s32.totalorder %s47, %s48
    %p60 = scmp.eq.s32.totalorder %s17, 1
    %p61 = por %p59, %p60
    %p63 = scmp.ne.s32.totalorder %s48, %s62
    %p64 = scmp.eq.s32.totalorder %s17, 0
    %p65 = por %p63, %p64
    %s67 = sadd.s32 %s66, 1
    %p70 = scmp.eq.s32.totalorder %s11, 1
    %p71 = scmp.ne.s32.totalorder %s66, %s68
    %p72 = scmp.eq.s32.totalorder %s11, 0
    %p73 = por %p71, %p72
    %p74 = scmp.ne.s32.totalorder %s66, %s68
    %p75 = scmp.eq.s32.totalorder %s16, 1
    %p76 = por %p74, %p75
    %p77 = scmp.ne.s32.totalorder %s68, %s69
    %p78 = scmp.eq.s32.totalorder %s16, 0
    %p79 = por %p77, %p78
    %p80 = scmp.ne.s32.totalorder %s68, %s69
    %p81 = scmp.eq.s32.totalorder %s17, 1
    %p82 = por %p80, %p81
    %p84 = scmp.ne.s32.totalorder %s69, %s83
    %p85 = scmp.eq.s32.totalorder %s17, 0
    %p86 = por %p84, %p85
    %s88 = sadd.s32 %s87, 1
    %p91 = scmp.eq.s32.totalorder %s11, 1
    %p92 = scmp.ne.s32.totalorder %s87, %s89
    %p93 = scmp.eq.s32.totalorder %s11, 0
    %p94 = por %p92, %p93
    %p95 = scmp.ne.s32.totalorder %s87, %s89
    %p96 = scmp.eq.s32.totalorder %s16, 1
    %p97 = por %p95, %p96
    %p98 = scmp.ne.s32.totalorder %s89, %s90
    %p99 = scmp.eq.s32.totalorder %s16, 0
    %p100 = por %p98, %p99
    %p101 = scmp.ne.s32.totalorder %s89, %s90
    %p102 = scmp.eq.s32.totalorder %s17, 1
    %p103 = por %p101, %p102
    %p105 = scmp.ne.s32.totalorder %s90, %s104
    %p106 = scmp.eq.s32.totalorder %s17, 0
    %p107 = por %p105, %p106
    %s109 = sadd.s32 %s108, 1
    %p112 = scmp.eq.s32.totalorder %s11, 1
    %p113 = scmp.ne.s32.totalorder %s108, %s110
    %p114 = scmp.eq.s32.totalorder %s11, 0
    %p115 = por %p113, %p114
    %p116 = scmp.ne.s32.totalorder %s108, %s110
    %p117 = scmp.eq.s32.totalorder %s16, 1
    %p118 = por %p116, %p117
    %p119 = scmp.ne.s32.totalorder %s110, %s111
    %p120 = scmp.eq.s32.totalorder %s16, 0
    %p121 = por %p119, %p120
    %p122 = scmp.ne.s32.totalorder %s110, %s111
    %p123 = scmp.eq.s32.totalorder %s17, 1
    %p124 = por %p122, %p123
    %p126 = scmp.ne.s32.totalorder %s111, %s125
    %p127 = scmp.eq.s32.totalorder %s17, 0
    %p128 = por %p126, %p127
    %s129 = ssub.s32 %s11, %s18
    %p130 = scmp.eq.s32.totalorder %s129, 0
    %s132 = sadd.s32 %s131, 1
    %s133 = scalar_select %p130, %s131, %s132
    %p136 = pneg %p130
    %p137 = scmp.eq.s32.totalorder %s11, 1
    %p138 = por %p136, %p137
    %p139 = scmp.ne.s32.totalorder %s131, %s134
    %p140 = scmp.eq.s32.totalorder %s11, 0
    %p141 = por %p139, %p140
    %p142 = scmp.ne.s32.totalorder %s131, %s134
    %p143 = scmp.eq.s32.totalorder %s16, 1
    %p144 = por %p142, %p143
    %p145 = scmp.ne.s32.totalorder %s134, %s135
    %p146 = scmp.eq.s32.totalorder %s16, 0
    %p147 = por %p145, %p146
    %p148 = scmp.ne.s32.totalorder %s134, %s135
    %p149 = scmp.eq.s32.totalorder %s17, 1
    %p150 = por %p148, %p149
    %p152 = scmp.ne.s32.totalorder %s135, %s151
    %p153 = scmp.eq.s32.totalorder %s17, 0
    %p154 = por %p152, %p153
    %p155 = scmp.le.s32.totalorder 1, %s11
    %p156 = scmp.lt.s32.totalorder %s11, 3
    %p157 = pnand %p155, %p156
    %p158 = pneg %p157
    // Predicated region
    $region9: #{tpu_custom_call.1} parent=5 // pred_check
      _
    $region10: #{tpu_custom_call.1} parent=5 // pred_check_branch
      %160 = sbr.rel (%p157) target = $region12
    $region11: #{tpu_custom_call.1} parent=5 // pred_region
      %s161 = ssub.s32 %s11, 1
      // Predicated region
      $region13: #{tpu_custom_call.1} parent=11 // pred_check
        %p162 = pneg %p58
      $region14: #{tpu_custom_call.1} parent=11 // pred_check_branch
        %164 = sbr.rel (%p162) target = $region16
      $region15: #{tpu_custom_call.1} parent=11 // pred_region
        _
      $region16: #{tpu_custom_call.1} parent=11 // pred_fallthru
        _
      // Predicated region
      $region17: #{tpu_custom_call.1} parent=11 // pred_check
        %p165 = pneg %p79
      $region18: #{tpu_custom_call.1} parent=11 // pred_check_branch
        %167 = sbr.rel (%p165) target = $region20
      $region19: #{tpu_custom_call.1} parent=11 // pred_region
        _
      $region20: #{tpu_custom_call.1} parent=11 // pred_fallthru
        _
      // Predicated region
      $region21: #{tpu_custom_call.1} parent=11 // pred_check
        %p168 = pneg %p100
      $region22: #{tpu_custom_call.1} parent=11 // pred_check_branch
        %170 = sbr.rel (%p168) target = $region24
      $region23: #{tpu_custom_call.1} parent=11 // pred_region
        _
      $region24: #{tpu_custom_call.1} parent=11 // pred_fallthru
        _
      // Predicated region
      $region25: #{tpu_custom_call.1} parent=11 // pred_check
        %p171 = pneg %p121
      $region26: #{tpu_custom_call.1} parent=11 // pred_check_branch
        %173 = sbr.rel (%p171) target = $region28
      $region27: #{tpu_custom_call.1} parent=11 // pred_region
        _
      $region28: #{tpu_custom_call.1} parent=11 // pred_fallthru
        _
    $region12: #{tpu_custom_call.1} parent=5 // pred_fallthru
      _
    %p174 = scmp.lt.s32.totalorder %s11, 2
    // Predicated region
    $region29: #{tpu_custom_call.1} parent=5 // pred_check
      %p175 = pneg %p174
    $region30: #{tpu_custom_call.1} parent=5 // pred_check_branch
      %177 = sbr.rel (%p175) target = $region32
    $region31: #{tpu_custom_call.1} parent=5 // pred_region
      // Predicated region
      $region33: #{tpu_custom_call.1} parent=31 // pred_check
        %p178 = pneg %p31
      $region34: #{tpu_custom_call.1} parent=31 // pred_check_branch
        %180 = sbr.rel (%p178) target = $region36
      $region35: #{tpu_custom_call.1} parent=31 // pred_region
        %p181 = scmp.lt.s32.totalorder %s11, 1
        %s182 = scalar_select %p181, %s11, 1
        %s183 = smul.addr %s182, 16
        %s184 = smul.addr %s183, 8
        %s185 = scalar_lea.vmem %s0, %s184
      $region36: #{tpu_custom_call.1} parent=31 // pred_fallthru
        _
    $region32: #{tpu_custom_call.1} parent=5 // pred_fallthru
      _
    %p186 = scmp.le.s32.totalorder 1, %s11
    %p187 = scmp.lt.s32.totalorder %s11, 3
    %p188 = pnand %p186, %p187
    %p189 = pneg %p188
    // Predicated region
    $region37: #{tpu_custom_call.1} parent=5 // pred_check
      _
    $region38: #{tpu_custom_call.1} parent=5 // pred_check_branch
      %191 = sbr.rel (%p188) target = $region40
    $region39: #{tpu_custom_call.1} parent=5 // pred_region
      %s192 = ssub.s32 %s11, 1
      %p193 = scmp.lt.s32.totalorder %s16, 1
      %s194 = scalar_select %p193, %s16, 1
      %s195 = smul.addr %s194, 16
      %s196 = smul.addr %s195, 8
      %s197 = scalar_lea.vmem %s0, %s196
      %p198 = pneg %p37
      %p199 = pneg %p34
      %p200 = pneg %p58
      %p201 = pneg %p55
      %p202 = pneg %p79
      %p203 = pneg %p76
      %p204 = pneg %p100
      %p205 = pneg %p97
      %p206 = pneg %p121
      %p207 = pneg %p118
      %p208 = pneg %p147
      %p209 = pneg %p144
      %s210 = smul.u32 8, %s16
      %p211 = scmp.lt.s32.totalorder %s210, 15
      %s212 = scalar_select %p211, %s210, 15
      %s213 = smul.addr %s212, 8
      %s214 = scalar_lea.vmem %s5, %s213
      %p215 = scmp.lt.s32.totalorder %s16, 1
      %s216 = scalar_select %p215, %s16, 1
      %s217 = smul.addr %s216, 16
      %s218 = smul.addr %s217, 8
      %s219 = scalar_lea.vmem %s0, %s218
      %s220 = smul.u32 8, %s16
      %p221 = scmp.lt.s32.totalorder %s220, 15
      %s222 = scalar_select %p221, %s220, 15
      %s223 = smul.addr %s222, 8
      %s224 = scalar_lea.vmem %s5, %s223
      %s225 = smul.u32 8, %s16
      %v226 = vld [vmem:[%s219] sm:$0xff]
      %v227 = vld [vmem:[%s219 + $0x8] sm:$0xff]
      %v228 = vld [vmem:[%s219 + $0x10] sm:$0xff]
      %v229 = vld [vmem:[%s219 + $0x18] sm:$0xff]
      %v230 = vld [vmem:[%s219 + $0x20] sm:$0xff]
      %v231 = vld [vmem:[%s219 + $0x28] sm:$0xff]
      %v232 = vld [vmem:[%s219 + $0x30] sm:$0xff]
      %v233 = vld [vmem:[%s219 + $0x38] sm:$0xff]
      %v234 = vld [vmem:[%s219 + $0x40] sm:$0xff]
      %v235 = vld [vmem:[%s219 + $0x48] sm:$0xff]
      %v236 = vld [vmem:[%s219 + $0x50] sm:$0xff]
      %v237 = vld [vmem:[%s219 + $0x58] sm:$0xff]
      %v238 = vld [vmem:[%s219 + $0x60] sm:$0xff]
      %v239 = vld [vmem:[%s219 + $0x68] sm:$0xff]
      %v240 = vld [vmem:[%s219 + $0x70] sm:$0xff]
      %v241 = vld [vmem:[%s219 + $0x78] sm:$0xff]
      %258 = vrot.lane.b32.xlu0 %v226, 124
      %v259 = vpop.permute.xlu0 %258
      %260 = vrot.lane.b32.xlu0 %v227, 124
      %v261 = vpop.permute.xlu0 %260
      %262 = vrot.lane.b32.xlu0 %v228, 124
      %v263 = vpop.permute.xlu0 %262
      %264 = vrot.lane.b32.xlu0 %v229, 124
      %v265 = vpop.permute.xlu0 %264
      %266 = vrot.lane.b32.xlu0 %v230, 124
      %v267 = vpop.permute.xlu0 %266
      %268 = vrot.lane.b32.xlu0 %v231, 124
      %v269 = vpop.permute.xlu0 %268
      %270 = vrot.lane.b32.xlu0 %v232, 124
      %v271 = vpop.permute.xlu0 %270
      %272 = vrot.lane.b32.xlu0 %v233, 124
      %v273 = vpop.permute.xlu0 %272
      %274 = vrot.lane.b32.xlu0 %v234, 124
      %v275 = vpop.permute.xlu0 %274
      %276 = vrot.lane.b32.xlu0 %v235, 124
      %v277 = vpop.permute.xlu0 %276
      %278 = vrot.lane.b32.xlu0 %v236, 124
      %v279 = vpop.permute.xlu0 %278
      %280 = vrot.lane.b32.xlu0 %v237, 124
      %v281 = vpop.permute.xlu0 %280
      %282 = vrot.lane.b32.xlu0 %v238, 124
      %v283 = vpop.permute.xlu0 %282
      %284 = vrot.lane.b32.xlu0 %v239, 124
      %v285 = vpop.permute.xlu0 %284
      %286 = vrot.lane.b32.xlu0 %v240, 124
      %v287 = vpop.permute.xlu0 %286
      %288 = vrot.lane.b32.xlu0 %v241, 124
      %v289 = vpop.permute.xlu0 %288
      %v306 = vmax.f32 %v226, %v259
      %v307 = vmax.f32 %v227, %v261
      %v308 = vmax.f32 %v228, %v263
      %v309 = vmax.f32 %v229, %v265
      %v310 = vmax.f32 %v230, %v267
      %v311 = vmax.f32 %v231, %v269
      %v312 = vmax.f32 %v232, %v271
      %v313 = vmax.f32 %v233, %v273
      %v314 = vmax.f32 %v234, %v275
      %v315 = vmax.f32 %v235, %v277
      %v316 = vmax.f32 %v236, %v279
      %v317 = vmax.f32 %v237, %v281
      %v318 = vmax.f32 %v238, %v283
      %v319 = vmax.f32 %v239, %v285
      %v320 = vmax.f32 %v240, %v287
      %v321 = vmax.f32 %v241, %v289
      %v322 = vmax.f32 %v306, %v307
      %v323 = vmax.f32 %v308, %v309
      %v324 = vmax.f32 %v310, %v311
      %v325 = vmax.f32 %v312, %v313
      %v326 = vmax.f32 %v314, %v315
      %v327 = vmax.f32 %v316, %v317
      %v328 = vmax.f32 %v318, %v319
      %v329 = vmax.f32 %v320, %v321
      %vm330 = vcmask 31744
      %331 = vst.msk [vmem:[#allocation2] sm:$0xff] %vm330, 0.0
      %vm332 = vcmask 25600
      %333 = vst.msk [vmem:[#allocation2 + $0x8] sm:$0x3] %vm332, 0.0
      %s334 = scalar_lea.vmem [#allocation2], 144
      %335 = vst.msk [vmem:[%s334] sm:$0xff] %vm330, 0.0
      %336 = vst.msk [vmem:[%s334 + $0x8] sm:$0x3] %vm332, 0.0
      %s337 = scalar_lea.vmem [#allocation2], 16
      %vm338 = vcmask 24576
      %339 = vst.msk [vmem:[%s337] sm:$0x1] %vm338, 0.0
      %340 = vst.msk [vmem:[%s337 + $0x10] sm:$0x1] %vm338, 0.0
      %341 = vst.msk [vmem:[%s337 + $0x20] sm:$0x1] %vm338, 0.0
      %342 = vst.msk [vmem:[%s337 + $0x30] sm:$0x1] %vm338, 0.0
      %343 = vst.msk [vmem:[%s337 + $0x40] sm:$0x1] %vm338, 0.0
      %344 = vst.msk [vmem:[%s337 + $0x50] sm:$0x1] %vm338, 0.0
      %345 = vst.msk [vmem:[%s337 + $0x60] sm:$0x1] %vm338, 0.0
      %346 = vst.msk [vmem:[%s337 + $0x70] sm:$0x1] %vm338, 0.0
      %347 = vst.msk [vmem:[%s337 + $0x9] sm:$0x1] %vm338, 0.0
      %348 = vst.msk [vmem:[%s337 + $0x19] sm:$0x1] %vm338, 0.0
      %349 = vst.msk [vmem:[%s337 + $0x29] sm:$0x1] %vm338, 0.0
      %350 = vst.msk [vmem:[%s337 + $0x39] sm:$0x1] %vm338, 0.0
      %351 = vst.msk [vmem:[%s337 + $0x49] sm:$0x1] %vm338, 0.0
      %352 = vst.msk [vmem:[%s337 + $0x59] sm:$0x1] %vm338, 0.0
      %353 = vst.msk [vmem:[%s337 + $0x69] sm:$0x1] %vm338, 0.0
      %354 = vst.msk [vmem:[%s337 + $0x79] sm:$0x1] %vm338, 0.0
      %355 = vst.msk [vmem:[%s337 + $0x1] sm:$0xff] %vm330, %v322
      %356 = vst.msk [vmem:[%s337 + $0x11] sm:$0xff] %vm330, %v323
      %357 = vst.msk [vmem:[%s337 + $0x21] sm:$0xff] %vm330, %v324
      %358 = vst.msk [vmem:[%s337 + $0x31] sm:$0xff] %vm330, %v325
      %359 = vst.msk [vmem:[%s337 + $0x41] sm:$0xff] %vm330, %v326
      %360 = vst.msk [vmem:[%s337 + $0x51] sm:$0xff] %vm330, %v327
      %361 = vst.msk [vmem:[%s337 + $0x61] sm:$0xff] %vm330, %v328
      %362 = vst.msk [vmem:[%s337 + $0x71] sm:$0xff] %vm330, %v329
      %v363 = vld [vmem:[#allocation2] sm:$0xff]
      %v364 = vld [vmem:[#allocation2 + $0x10] sm:$0xff]
      %v365 = vld [vmem:[#allocation2 + $0x20] sm:$0xff]
      %v366 = vld [vmem:[#allocation2 + $0x30] sm:$0xff]
      %v367 = vld [vmem:[#allocation2 + $0x40] sm:$0xff]
      %v368 = vld [vmem:[#allocation2 + $0x50] sm:$0xff]
      %v369 = vld [vmem:[#allocation2 + $0x60] sm:$0xff]
      %v370 = vld [vmem:[#allocation2 + $0x70] sm:$0xff]
      %371 = vst.msk [vmem:[#allocation3] sm:$0xff] %vm330, %v363
      %372 = vst.msk [vmem:[#allocation3 + $0x8] sm:$0xff] %vm330, %v364
      %373 = vst.msk [vmem:[#allocation3 + $0x10] sm:$0xff] %vm330, %v365
      %374 = vst.msk [vmem:[#allocation3 + $0x18] sm:$0xff] %vm330, %v366
      %375 = vst.msk [vmem:[#allocation3 + $0x20] sm:$0xff] %vm330, %v367
      %376 = vst.msk [vmem:[#allocation3 + $0x28] sm:$0xff] %vm330, %v368
      %377 = vst.msk [vmem:[#allocation3 + $0x30] sm:$0xff] %vm330, %v369
      %378 = vst.msk [vmem:[#allocation3 + $0x38] sm:$0xff] %vm330, %v370
      %v379 = vld [vmem:[#allocation2 + $0x1] sm:$0xff]
      %v380 = vld [vmem:[#allocation2 + $0x11] sm:$0xff]
      %v381 = vld [vmem:[#allocation2 + $0x21] sm:$0xff]
      %v382 = vld [vmem:[#allocation2 + $0x31] sm:$0xff]
      %v383 = vld [vmem:[#allocation2 + $0x41] sm:$0xff]
      %v384 = vld [vmem:[#allocation2 + $0x51] sm:$0xff]
      %v385 = vld [vmem:[#allocation2 + $0x61] sm:$0xff]
      %v386 = vld [vmem:[#allocation2 + $0x71] sm:$0xff]
      %395 = vrot.lane.b32.xlu0 %v379, 4
      %v396 = vpop.permute.xlu0 %395
      %397 = vrot.lane.b32.xlu0 %v380, 4
      %v398 = vpop.permute.xlu0 %397
      %399 = vrot.lane.b32.xlu0 %v381, 4
      %v400 = vpop.permute.xlu0 %399
      %401 = vrot.lane.b32.xlu0 %v382, 4
      %v402 = vpop.permute.xlu0 %401
      %403 = vrot.lane.b32.xlu0 %v383, 4
      %v404 = vpop.permute.xlu0 %403
      %405 = vrot.lane.b32.xlu0 %v384, 4
      %v406 = vpop.permute.xlu0 %405
      %407 = vrot.lane.b32.xlu0 %v385, 4
      %v408 = vpop.permute.xlu0 %407
      %409 = vrot.lane.b32.xlu0 %v386, 4
      %v410 = vpop.permute.xlu0 %409
      %vm419 = vcmask 64544
      %420 = vst.msk [vmem:[#allocation3] sm:$0xff] %vm419, %v396
      %421 = vst.msk [vmem:[#allocation3 + $0x8] sm:$0xff] %vm419, %v398
      %422 = vst.msk [vmem:[#allocation3 + $0x10] sm:$0xff] %vm419, %v400
      %423 = vst.msk [vmem:[#allocation3 + $0x18] sm:$0xff] %vm419, %v402
      %424 = vst.msk [vmem:[#allocation3 + $0x20] sm:$0xff] %vm419, %v404
      %425 = vst.msk [vmem:[#allocation3 + $0x28] sm:$0xff] %vm419, %v406
      %426 = vst.msk [vmem:[#allocation3 + $0x30] sm:$0xff] %vm419, %v408
      %427 = vst.msk [vmem:[#allocation3 + $0x38] sm:$0xff] %vm419, %v410
      %v428 = vld [vmem:[#allocation2 + $0x2] sm:$0xff]
      %v429 = vld [vmem:[#allocation2 + $0x12] sm:$0xff]
      %v430 = vld [vmem:[#allocation2 + $0x22] sm:$0xff]
      %v431 = vld [vmem:[#allocation2 + $0x32] sm:$0xff]
      %v432 = vld [vmem:[#allocation2 + $0x42] sm:$0xff]
      %v433 = vld [vmem:[#allocation2 + $0x52] sm:$0xff]
      %v434 = vld [vmem:[#allocation2 + $0x62] sm:$0xff]
      %v435 = vld [vmem:[#allocation2 + $0x72] sm:$0xff]
      %444 = vrot.lane.b32.xlu0 %v428, 8
      %v445 = vpop.permute.xlu0 %444
      %446 = vrot.lane.b32.xlu0 %v429, 8
      %v447 = vpop.permute.xlu0 %446
      %448 = vrot.lane.b32.xlu0 %v430, 8
      %v449 = vpop.permute.xlu0 %448
      %450 = vrot.lane.b32.xlu0 %v431, 8
      %v451 = vpop.permute.xlu0 %450
      %452 = vrot.lane.b32.xlu0 %v432, 8
      %v453 = vpop.permute.xlu0 %452
      %454 = vrot.lane.b32.xlu0 %v433, 8
      %v455 = vpop.permute.xlu0 %454
      %456 = vrot.lane.b32.xlu0 %v434, 8
      %v457 = vpop.permute.xlu0 %456
      %458 = vrot.lane.b32.xlu0 %v435, 8
      %v459 = vpop.permute.xlu0 %458
      %vm468 = vcmask 97344
      %469 = vst.msk [vmem:[#allocation3] sm:$0xff] %vm468, %v445
      %470 = vst.msk [vmem:[#allocation3 + $0x8] sm:$0xff] %vm468, %v447
      %471 = vst.msk [vmem:[#allocation3 + $0x10] sm:$0xff] %vm468, %v449
      %472 = vst.msk [vmem:[#allocation3 + $0x18] sm:$0xff] %vm468, %v451
      %473 = vst.msk [vmem:[#allocation3 + $0x20] sm:$0xff] %vm468, %v453
      %474 = vst.msk [vmem:[#allocation3 + $0x28] sm:$0xff] %vm468, %v455
      %475 = vst.msk [vmem:[#allocation3 + $0x30] sm:$0xff] %vm468, %v457
      %476 = vst.msk [vmem:[#allocation3 + $0x38] sm:$0xff] %vm468, %v459
      %v477 = vld [vmem:[%s337] sm:$0xff]
      %v478 = vld [vmem:[%s337 + $0x10] sm:$0xff]
      %v479 = vld [vmem:[%s337 + $0x20] sm:$0xff]
      %v480 = vld [vmem:[%s337 + $0x30] sm:$0xff]
      %v481 = vld [vmem:[%s337 + $0x40] sm:$0xff]
      %v482 = vld [vmem:[%s337 + $0x50] sm:$0xff]
      %v483 = vld [vmem:[%s337 + $0x60] sm:$0xff]
      %v484 = vld [vmem:[%s337 + $0x70] sm:$0xff]
      %493 = vrot.lane.b32.xlu0 %v477, 12
      %v494 = vpop.permute.xlu0 %493
      %495 = vrot.lane.b32.xlu0 %v478, 12
      %v496 = vpop.permute.xlu0 %495
      %497 = vrot.lane.b32.xlu0 %v479, 12
      %v498 = vpop.permute.xlu0 %497
      %499 = vrot.lane.b32.xlu0 %v480, 12
      %v500 = vpop.permute.xlu0 %499
      %501 = vrot.lane.b32.xlu0 %v481, 12
      %v502 = vpop.permute.xlu0 %501
      %503 = vrot.lane.b32.xlu0 %v482, 12
      %v504 = vpop.permute.xlu0 %503
      %505 = vrot.lane.b32.xlu0 %v483, 12
      %v506 = vpop.permute.xlu0 %505
      %507 = vrot.lane.b32.xlu0 %v484, 12
      %v508 = vpop.permute.xlu0 %507
      %vm517 = vcmask 130144
      %518 = vst.msk [vmem:[#allocation3] sm:$0xff] %vm517, %v494
      %519 = vst.msk [vmem:[#allocation3 + $0x8] sm:$0xff] %vm517, %v496
      %520 = vst.msk [vmem:[#allocation3 + $0x10] sm:$0xff] %vm517, %v498
      %521 = vst.msk [vmem:[#allocation3 + $0x18] sm:$0xff] %vm517, %v500
      %522 = vst.msk [vmem:[#allocation3 + $0x20] sm:$0xff] %vm517, %v502
      %523 = vst.msk [vmem:[#allocation3 + $0x28] sm:$0xff] %vm517, %v504
      %524 = vst.msk [vmem:[#allocation3 + $0x30] sm:$0xff] %vm517, %v506
      %525 = vst.msk [vmem:[#allocation3 + $0x38] sm:$0xff] %vm517, %v508
      %v526 = vld [vmem:[%s337 + $0x1] sm:$0xff]
      %v527 = vld [vmem:[%s337 + $0x11] sm:$0xff]
      %v528 = vld [vmem:[%s337 + $0x21] sm:$0xff]
      %v529 = vld [vmem:[%s337 + $0x31] sm:$0xff]
      %v530 = vld [vmem:[%s337 + $0x41] sm:$0xff]
      %v531 = vld [vmem:[%s337 + $0x51] sm:$0xff]
      %v532 = vld [vmem:[%s337 + $0x61] sm:$0xff]
      %v533 = vld [vmem:[%s337 + $0x71] sm:$0xff]
      %542 = vrot.lane.b32.xlu0 %v526, 16
      %v543 = vpop.permute.xlu0 %542
      %544 = vrot.lane.b32.xlu0 %v527, 16
      %v545 = vpop.permute.xlu0 %544
      %546 = vrot.lane.b32.xlu0 %v528, 16
      %v547 = vpop.permute.xlu0 %546
      %548 = vrot.lane.b32.xlu0 %v529, 16
      %v549 = vpop.permute.xlu0 %548
      %550 = vrot.lane.b32.xlu0 %v530, 16
      %v551 = vpop.permute.xlu0 %550
      %552 = vrot.lane.b32.xlu0 %v531, 16
      %v553 = vpop.permute.xlu0 %552
      %554 = vrot.lane.b32.xlu0 %v532, 16
      %v555 = vpop.permute.xlu0 %554
      %556 = vrot.lane.b32.xlu0 %v533, 16
      %v557 = vpop.permute.xlu0 %556
      %vm566 = vcmask 162944
      %567 = vst.msk [vmem:[#allocation3] sm:$0xff] %vm566, %v543
      %568 = vst.msk [vmem:[#allocation3 + $0x8] sm:$0xff] %vm566, %v545
      %569 = vst.msk [vmem:[#allocation3 + $0x10] sm:$0xff] %vm566, %v547
      %570 = vst.msk [vmem:[#allocation3 + $0x18] sm:$0xff] %vm566, %v549
      %571 = vst.msk [vmem:[#allocation3 + $0x20] sm:$0xff] %vm566, %v551
      %572 = vst.msk [vmem:[#allocation3 + $0x28] sm:$0xff] %vm566, %v553
      %573 = vst.msk [vmem:[#allocation3 + $0x30] sm:$0xff] %vm566, %v555
      %574 = vst.msk [vmem:[#allocation3 + $0x38] sm:$0xff] %vm566, %v557
      %v575 = vld [vmem:[%s337 + $0x2] sm:$0xff]
      %v576 = vld [vmem:[%s337 + $0x12] sm:$0xff]
      %v577 = vld [vmem:[%s337 + $0x22] sm:$0xff]
      %v578 = vld [vmem:[%s337 + $0x32] sm:$0xff]
      %v579 = vld [vmem:[%s337 + $0x42] sm:$0xff]
      %v580 = vld [vmem:[%s337 + $0x52] sm:$0xff]
      %v581 = vld [vmem:[%s337 + $0x62] sm:$0xff]
      %v582 = vld [vmem:[%s337 + $0x72] sm:$0xff]
      %591 = vrot.lane.b32.xlu0 %v575, 20
      %v592 = vpop.permute.xlu0 %591
      %593 = vrot.lane.b32.xlu0 %v576, 20
      %v594 = vpop.permute.xlu0 %593
      %595 = vrot.lane.b32.xlu0 %v577, 20
      %v596 = vpop.permute.xlu0 %595
      %597 = vrot.lane.b32.xlu0 %v578, 20
      %v598 = vpop.permute.xlu0 %597
      %599 = vrot.lane.b32.xlu0 %v579, 20
      %v600 = vpop.permute.xlu0 %599
      %601 = vrot.lane.b32.xlu0 %v580, 20
      %v602 = vpop.permute.xlu0 %601
      %603 = vrot.lane.b32.xlu0 %v581, 20
      %v604 = vpop.permute.xlu0 %603
      %605 = vrot.lane.b32.xlu0 %v582, 20
      %v606 = vpop.permute.xlu0 %605
      %vm615 = vcmask 195744
      %616 = vst.msk [vmem:[#allocation3] sm:$0xff] %vm615, %v592
      %617 = vst.msk [vmem:[#allocation3 + $0x8] sm:$0xff] %vm615, %v594
      %618 = vst.msk [vmem:[#allocation3 + $0x10] sm:$0xff] %vm615, %v596
      %619 = vst.msk [vmem:[#allocation3 + $0x18] sm:$0xff] %vm615, %v598
      %620 = vst.msk [vmem:[#allocation3 + $0x20] sm:$0xff] %vm615, %v600
      %621 = vst.msk [vmem:[#allocation3 + $0x28] sm:$0xff] %vm615, %v602
      %622 = vst.msk [vmem:[#allocation3 + $0x30] sm:$0xff] %vm615, %v604
      %623 = vst.msk [vmem:[#allocation3 + $0x38] sm:$0xff] %vm615, %v606
      %s624 = scalar_lea.vmem [#allocation2], 32
      %v625 = vld [vmem:[%s624] sm:$0xff]
      %v626 = vld [vmem:[%s624 + $0x10] sm:$0xff]
      %v627 = vld [vmem:[%s624 + $0x20] sm:$0xff]
      %v628 = vld [vmem:[%s624 + $0x30] sm:$0xff]
      %v629 = vld [vmem:[%s624 + $0x40] sm:$0xff]
      %v630 = vld [vmem:[%s624 + $0x50] sm:$0xff]
      %v631 = vld [vmem:[%s624 + $0x60] sm:$0xff]
      %v632 = vld [vmem:[%s624 + $0x70] sm:$0xff]
      %641 = vrot.lane.b32.xlu0 %v625, 24
      %v642 = vpop.permute.xlu0 %641
      %643 = vrot.lane.b32.xlu0 %v626, 24
      %v644 = vpop.permute.xlu0 %643
      %645 = vrot.lane.b32.xlu0 %v627, 24
      %v646 = vpop.permute.xlu0 %645
      %647 = vrot.lane.b32.xlu0 %v628, 24
      %v648 = vpop.permute.xlu0 %647
      %649 = vrot.lane.b32.xlu0 %v629, 24
      %v650 = vpop.permute.xlu0 %649
      %651 = vrot.lane.b32.xlu0 %v630, 24
      %v652 = vpop.permute.xlu0 %651
      %653 = vrot.lane.b32.xlu0 %v631, 24
      %v654 = vpop.permute.xlu0 %653
      %655 = vrot.lane.b32.xlu0 %v632, 24
      %v656 = vpop.permute.xlu0 %655
      %vm665 = vcmask 228544
      %666 = vst.msk [vmem:[#allocation3] sm:$0xff] %vm665, %v642
      %667 = vst.msk [vmem:[#allocation3 + $0x8] sm:$0xff] %vm665, %v644
      %668 = vst.msk [vmem:[#allocation3 + $0x10] sm:$0xff] %vm665, %v646
      %669 = vst.msk [vmem:[#allocation3 + $0x18] sm:$0xff] %vm665, %v648
      %670 = vst.msk [vmem:[#allocation3 + $0x20] sm:$0xff] %vm665, %v650
      %671 = vst.msk [vmem:[#allocation3 + $0x28] sm:$0xff] %vm665, %v652
      %672 = vst.msk [vmem:[#allocation3 + $0x30] sm:$0xff] %vm665, %v654
      %673 = vst.msk [vmem:[#allocation3 + $0x38] sm:$0xff] %vm665, %v656
      %v674 = vld [vmem:[%s624 + $0x1] sm:$0xff]
      %v675 = vld [vmem:[%s624 + $0x11] sm:$0xff]
      %v676 = vld [vmem:[%s624 + $0x21] sm:$0xff]
      %v677 = vld [vmem:[%s624 + $0x31] sm:$0xff]
      %v678 = vld [vmem:[%s624 + $0x41] sm:$0xff]
      %v679 = vld [vmem:[%s624 + $0x51] sm:$0xff]
      %v680 = vld [vmem:[%s624 + $0x61] sm:$0xff]
      %v681 = vld [vmem:[%s624 + $0x71] sm:$0xff]
      %690 = vrot.lane.b32.xlu0 %v674, 28
      %v691 = vpop.permute.xlu0 %690
      %692 = vrot.lane.b32.xlu0 %v675, 28
      %v693 = vpop.permute.xlu0 %692
      %694 = vrot.lane.b32.xlu0 %v676, 28
      %v695 = vpop.permute.xlu0 %694
      %696 = vrot.lane.b32.xlu0 %v677, 28
      %v697 = vpop.permute.xlu0 %696
      %698 = vrot.lane.b32.xlu0 %v678, 28
      %v699 = vpop.permute.xlu0 %698
      %700 = vrot.lane.b32.xlu0 %v679, 28
      %v701 = vpop.permute.xlu0 %700
      %702 = vrot.lane.b32.xlu0 %v680, 28
      %v703 = vpop.permute.xlu0 %702
      %704 = vrot.lane.b32.xlu0 %v681, 28
      %v705 = vpop.permute.xlu0 %704
      %vm714 = vcmask 261344
      %715 = vst.msk [vmem:[#allocation3] sm:$0xff] %vm714, %v691
      %716 = vst.msk [vmem:[#allocation3 + $0x8] sm:$0xff] %vm714, %v693
      %717 = vst.msk [vmem:[#allocation3 + $0x10] sm:$0xff] %vm714, %v695
      %718 = vst.msk [vmem:[#allocation3 + $0x18] sm:$0xff] %vm714, %v697
      %719 = vst.msk [vmem:[#allocation3 + $0x20] sm:$0xff] %vm714, %v699
      %720 = vst.msk [vmem:[#allocation3 + $0x28] sm:$0xff] %vm714, %v701
      %721 = vst.msk [vmem:[#allocation3 + $0x30] sm:$0xff] %vm714, %v703
      %722 = vst.msk [vmem:[#allocation3 + $0x38] sm:$0xff] %vm714, %v705
      %v723 = vld [vmem:[%s624 + $0x2] sm:$0xff]
      %v724 = vld [vmem:[%s624 + $0x12] sm:$0xff]
      %v725 = vld [vmem:[%s624 + $0x22] sm:$0xff]
      %v726 = vld [vmem:[%s624 + $0x32] sm:$0xff]
      %v727 = vld [vmem:[%s624 + $0x42] sm:$0xff]
      %v728 = vld [vmem:[%s624 + $0x52] sm:$0xff]
      %v729 = vld [vmem:[%s624 + $0x62] sm:$0xff]
      %v730 = vld [vmem:[%s624 + $0x72] sm:$0xff]
      %739 = vrot.lane.b32.xlu0 %v723, 32
      %v740 = vpop.permute.xlu0 %739
      %741 = vrot.lane.b32.xlu0 %v724, 32
      %v742 = vpop.permute.xlu0 %741
      %743 = vrot.lane.b32.xlu0 %v725, 32
      %v744 = vpop.permute.xlu0 %743
      %745 = vrot.lane.b32.xlu0 %v726, 32
      %v746 = vpop.permute.xlu0 %745
      %747 = vrot.lane.b32.xlu0 %v727, 32
      %v748 = vpop.permute.xlu0 %747
      %749 = vrot.lane.b32.xlu0 %v728, 32
      %v750 = vpop.permute.xlu0 %749
      %751 = vrot.lane.b32.xlu0 %v729, 32
      %v752 = vpop.permute.xlu0 %751
      %753 = vrot.lane.b32.xlu0 %v730, 32
      %v754 = vpop.permute.xlu0 %753
      %vm763 = vcmask 294144
      %764 = vst.msk [vmem:[#allocation3] sm:$0xff] %vm763, %v740
      %765 = vst.msk [vmem:[#allocation3 + $0x8] sm:$0xff] %vm763, %v742
      %766 = vst.msk [vmem:[#allocation3 + $0x10] sm:$0xff] %vm763, %v744
      %767 = vst.msk [vmem:[#allocation3 + $0x18] sm:$0xff] %vm763, %v746
      %768 = vst.msk [vmem:[#allocation3 + $0x20] sm:$0xff] %vm763, %v748
      %769 = vst.msk [vmem:[#allocation3 + $0x28] sm:$0xff] %vm763, %v750
      %770 = vst.msk [vmem:[#allocation3 + $0x30] sm:$0xff] %vm763, %v752
      %771 = vst.msk [vmem:[#allocation3 + $0x38] sm:$0xff] %vm763, %v754
      %v772 = vld [vmem:[#allocation3] sm:$0xff]
      %v773 = vld [vmem:[#allocation3 + $0x8] sm:$0xff]
      %v774 = vld [vmem:[#allocation3 + $0x10] sm:$0xff]
      %v775 = vld [vmem:[#allocation3 + $0x18] sm:$0xff]
      %v776 = vld [vmem:[#allocation3 + $0x20] sm:$0xff]
      %v777 = vld [vmem:[#allocation3 + $0x28] sm:$0xff]
      %v778 = vld [vmem:[#allocation3 + $0x30] sm:$0xff]
      %v779 = vld [vmem:[#allocation3 + $0x38] sm:$0xff]
      %v780 = vld [vmem:[%s1] sm:$0xff]
      %v781 = vld [vmem:[%s1 + $0x8] sm:$0xff]
      %v782 = vld [vmem:[%s1 + $0x10] sm:$0xff]
      %v783 = vld [vmem:[%s1 + $0x18] sm:$0xff]
      %v784 = vld [vmem:[%s1 + $0x20] sm:$0xf]
      %v785 = vld [vmem:[%s2] sm:$0x1]
      %v787 = vlaneseq
      %v788 = vshrl.u32 %v787, 7
      %v789 = vsub.s32 0, %v788
      %v790 = vrot.slane %v785, %v789
      %vm792 = vcmask 293888
      %v794 = vsel %vm792, %v772, 0
      %v797 = vsel %vm792, %v773, 0
      %v800 = vsel %vm792, %v774, 0
      %v803 = vsel %vm792, %v775, 0
      %v806 = vsel %vm792, %v776, 0
      %v809 = vsel %vm792, %v777, 0
      %v812 = vsel %vm792, %v778, 0
      %v815 = vsel %vm792, %v779, 0
      %vm817 = vcmask 1043456
      %v819 = vsel %vm817, %v784, 0
      %821 = vmatprep.subr.mxu0 0.0
      %822 = vmatpush1.msra.mxu0 %v780
      %823 = vmatprep.subr.mxu0 0.0
      %824 = vmatpush1.msra.mxu0 %v781
      %825 = vmatprep.subr.mxu0 0.0
      %826 = vmatpush1.msra.mxu0 %v782
      %827 = vmatprep.subr.mxu0 0.0
      %828 = vmatpush1.msra.mxu0 %v783
      %829 = vmatprep.subr.mxu0 0.0
      %830 = vmatpush1.msra.mxu0 %v819
      %831 = vmatprep.subr.mxu0 0.0
      %832 = vmatpush1.msra.mxu0 0.0
      %833 = vmatprep.subr.mxu0 0.0
      %834 = vmatpush1.msra.mxu0 0.0
      %835 = vmatprep.subr.mxu0 0.0
      %836 = vmatpush1.msra.mxu0 0.0
      %837 = vmatprep.subr.mxu0 0.0
      %838 = vmatpush1.msra.mxu0 0.0
      %839 = vmatprep.subr.mxu0 0.0
      %840 = vmatpush1.msra.mxu0 0.0
      %841 = vmatprep.subr.mxu0 0.0
      %842 = vmatpush1.msra.mxu0 0.0
      %843 = vmatprep.subr.mxu0 0.0
      %844 = vmatpush1.msra.mxu0 0.0
      %845 = vmatprep.subr.mxu0 0.0
      %846 = vmatpush1.msra.mxu0 0.0
      %847 = vmatprep.subr.mxu0 0.0
      %848 = vmatpush1.msra.mxu0 0.0
      %849 = vmatprep.subr.mxu0 0.0
      %850 = vmatpush1.msra.mxu0 0.0
      %851 = vmatprep.subr.mxu0 0.0
      %852 = vmatpush1.msra.mxu0 0.0
      %853 = vmatprep.subr.mxu0 0.0
      %854 = vmatpush1.msra.mxu0 0.0
      %855 = vmatprep.subr.mxu0 0.0
      %856 = vmatpush1.msra.mxu0 0.0
      %857 = vmatprep.subr.mxu0 0.0
      %858 = vmatpush1.msra.mxu0 0.0
      %859 = vmatprep.subr.mxu0 0.0
      %860 = vmatpush1.msra.mxu0 0.0
      %861 = vmatprep.subr.mxu0 0.0
      %862 = vmatpush1.msra.mxu0 0.0
      %863 = vmatprep.subr.mxu0 0.0
      %864 = vmatpush1.msra.mxu0 0.0
      %865 = vmatprep.subr.mxu0 0.0
      %866 = vmatpush1.msra.mxu0 0.0
      %867 = vmatprep.subr.mxu0 0.0
      %868 = vmatpush1.msra.mxu0 0.0
      %869 = vmatprep.subr.mxu0 0.0
      %870 = vmatpush1.msra.mxu0 0.0
      %871 = vmatprep.subr.mxu0 0.0
      %872 = vmatpush1.msra.mxu0 0.0
      %873 = vmatprep.subr.mxu0 0.0
      %874 = vmatpush1.msra.mxu0 0.0
      %875 = vmatprep.subr.mxu0 0.0
      %876 = vmatpush1.msra.mxu0 0.0
      %877 = vmatprep.subr.mxu0 0.0
      %878 = vmatpush1.msra.mxu0 0.0
      %879 = vmatprep.subr.mxu0 0.0
      %880 = vmatpush1.msra.mxu0 0.0
      %881 = vmatprep.subr.mxu0 0.0
      %882 = vmatpush1.msra.mxu0 0.0
      %883 = vmatprep.subr.mxu0 0.0
      %884 = vmatpush1.msra.mxu0 0.0
      %885 = vmatprep.mubr.f32.mxu0 0.0
      %886 = vmatmul.mubr.f32.gmra.mrb[0].mxu0 %v794
      %v887 = vpop.f32.mrb[0].mxu0
      %v888 = vadd.f32 %v790, %v887
      %v889 = vpop.f32.mrb[0].mxu0
      %890 = vmatprep.mubr.f32.mxu0 0.0
      %891 = vmatmul.mubr.f32.gmra.mrb[0].mxu0 %v797
      %v892 = vpop.f32.mrb[0].mxu0
      %v893 = vadd.f32 %v790, %v892
      %v894 = vpop.f32.mrb[0].mxu0
      %895 = vmatprep.mubr.f32.mxu0 0.0
      %896 = vmatmul.mubr.f32.gmra.mrb[0].mxu0 %v800
      %v897 = vpop.f32.mrb[0].mxu0
      %v898 = vadd.f32 %v790, %v897
      %v899 = vpop.f32.mrb[0].mxu0
      %900 = vmatprep.mubr.f32.mxu0 0.0
      %901 = vmatmul.mubr.f32.gmra.mrb[0].mxu0 %v803
      %v902 = vpop.f32.mrb[0].mxu0
      %v903 = vadd.f32 %v790, %v902
      %v904 = vpop.f32.mrb[0].mxu0
      %905 = vmatprep.mubr.f32.mxu0 0.0
      %906 = vmatmul.mubr.f32.gmra.mrb[0].mxu0 %v806
      %v907 = vpop.f32.mrb[0].mxu0
      %v908 = vadd.f32 %v790, %v907
      %v909 = vpop.f32.mrb[0].mxu0
      %910 = vmatprep.mubr.f32.mxu0 0.0
      %911 = vmatmul.mubr.f32.gmra.mrb[0].mxu0 %v809
      %v912 = vpop.f32.mrb[0].mxu0
      %v913 = vadd.f32 %v790, %v912
      %v914 = vpop.f32.mrb[0].mxu0
      %915 = vmatprep.mubr.f32.mxu0 0.0
      %916 = vmatmul.mubr.f32.gmra.mrb[0].mxu0 %v812
      %v917 = vpop.f32.mrb[0].mxu0
      %v918 = vadd.f32 %v790, %v917
      %v919 = vpop.f32.mrb[0].mxu0
      %920 = vmatprep.mubr.f32.mxu0 0.0
      %921 = vmatmul.mubr.f32.gmra.mrb[0].mxu0 %v815
      %v922 = vpop.f32.mrb[0].mxu0
      %v923 = vadd.f32 %v790, %v922
      %v924 = vpop.f32.mrb[0].mxu0
      %925 = vdwg.mxu0
      %vm926 = vcmp.ge.f32.partialorder %v888, 0.0
      %vm927 = vcmp.ge.f32.partialorder %v893, 0.0
      %vm928 = vcmp.ge.f32.partialorder %v898, 0.0
      %vm929 = vcmp.ge.f32.partialorder %v903, 0.0
      %vm930 = vcmp.ge.f32.partialorder %v908, 0.0
      %vm931 = vcmp.ge.f32.partialorder %v913, 0.0
      %vm932 = vcmp.ge.f32.partialorder %v918, 0.0
      %vm933 = vcmp.ge.f32.partialorder %v923, 0.0
      %v934 = vmul.f32 %v888, 0.01
      %v935 = vmul.f32 %v893, 0.01
      %v936 = vmul.f32 %v898, 0.01
      %v937 = vmul.f32 %v903, 0.01
      %v938 = vmul.f32 %v908, 0.01
      %v939 = vmul.f32 %v913, 0.01
      %v940 = vmul.f32 %v918, 0.01
      %v941 = vmul.f32 %v923, 0.01
      %v942 = vsel %vm926, %v888, %v934
      %v943 = vsel %vm927, %v893, %v935
      %v944 = vsel %vm928, %v898, %v936
      %v945 = vsel %vm929, %v903, %v937
      %v946 = vsel %vm930, %v908, %v938
      %v947 = vsel %vm931, %v913, %v939
      %v948 = vsel %vm932, %v918, %v940
      %v949 = vsel %vm933, %v923, %v941
      %vm950 = vcmask 64512
      %951 = vst.msk [vmem:[#allocation4] sm:$0xff] %vm950, 0.0
      %vm952 = vcmask 58368
      %953 = vst.msk [vmem:[#allocation4 + $0x8] sm:$0x3] %vm952, 0.0
      %s954 = scalar_lea.vmem [#allocation4], 144
      %955 = vst.msk [vmem:[%s954] sm:$0xff] %vm950, 0.0
      %956 = vst.msk [vmem:[%s954 + $0x8] sm:$0x3] %vm952, 0.0
      %s957 = scalar_lea.vmem [#allocation4], 16
      %vm958 = vcmask 57344
      %959 = vst.msk [vmem:[%s957] sm:$0x1] %vm958, 0.0
      %960 = vst.msk [vmem:[%s957 + $0x10] sm:$0x1] %vm958, 0.0
      %961 = vst.msk [vmem:[%s957 + $0x20] sm:$0x1] %vm958, 0.0
      %962 = vst.msk [vmem:[%s957 + $0x30] sm:$0x1] %vm958, 0.0
      %963 = vst.msk [vmem:[%s957 + $0x40] sm:$0x1] %vm958, 0.0
      %964 = vst.msk [vmem:[%s957 + $0x50] sm:$0x1] %vm958, 0.0
      %965 = vst.msk [vmem:[%s957 + $0x60] sm:$0x1] %vm958, 0.0
      %966 = vst.msk [vmem:[%s957 + $0x70] sm:$0x1] %vm958, 0.0
      %967 = vst.msk [vmem:[%s957 + $0x9] sm:$0x1] %vm958, 0.0
      %968 = vst.msk [vmem:[%s957 + $0x19] sm:$0x1] %vm958, 0.0
      %969 = vst.msk [vmem:[%s957 + $0x29] sm:$0x1] %vm958, 0.0
      %970 = vst.msk [vmem:[%s957 + $0x39] sm:$0x1] %vm958, 0.0
      %971 = vst.msk [vmem:[%s957 + $0x49] sm:$0x1] %vm958, 0.0
      %972 = vst.msk [vmem:[%s957 + $0x59] sm:$0x1] %vm958, 0.0
      %973 = vst.msk [vmem:[%s957 + $0x69] sm:$0x1] %vm958, 0.0
      %974 = vst.msk [vmem:[%s957 + $0x79] sm:$0x1] %vm958, 0.0
      %975 = vst.msk [vmem:[%s957 + $0x1] sm:$0xff] %vm950, %v942
      %976 = vst.msk [vmem:[%s957 + $0x11] sm:$0xff] %vm950, %v943
      %977 = vst.msk [vmem:[%s957 + $0x21] sm:$0xff] %vm950, %v944
      %978 = vst.msk [vmem:[%s957 + $0x31] sm:$0xff] %vm950, %v945
      %979 = vst.msk [vmem:[%s957 + $0x41] sm:$0xff] %vm950, %v946
      %980 = vst.msk [vmem:[%s957 + $0x51] sm:$0xff] %vm950, %v947
      %981 = vst.msk [vmem:[%s957 + $0x61] sm:$0xff] %vm950, %v948
      %982 = vst.msk [vmem:[%s957 + $0x71] sm:$0xff] %vm950, %v949
      %v983 = vld [vmem:[#allocation4] sm:$0xff]
      %v984 = vld [vmem:[#allocation4 + $0x10] sm:$0xff]
      %v985 = vld [vmem:[#allocation4 + $0x20] sm:$0xff]
      %v986 = vld [vmem:[#allocation4 + $0x30] sm:$0xff]
      %v987 = vld [vmem:[#allocation4 + $0x40] sm:$0xff]
      %v988 = vld [vmem:[#allocation4 + $0x50] sm:$0xff]
      %v989 = vld [vmem:[#allocation4 + $0x60] sm:$0xff]
      %v990 = vld [vmem:[#allocation4 + $0x70] sm:$0xff]
      %991 = vst.msk [vmem:[#allocation5] sm:$0xff] %vm950, %v983
      %992 = vst.msk [vmem:[#allocation5 + $0x8] sm:$0xff] %vm950, %v984
      %993 = vst.msk [vmem:[#allocation5 + $0x10] sm:$0xff] %vm950, %v985
      %994 = vst.msk [vmem:[#allocation5 + $0x18] sm:$0xff] %vm950, %v986
      %995 = vst.msk [vmem:[#allocation5 + $0x20] sm:$0xff] %vm950, %v987
      %996 = vst.msk [vmem:[#allocation5 + $0x28] sm:$0xff] %vm950, %v988
      %997 = vst.msk [vmem:[#allocation5 + $0x30] sm:$0xff] %vm950, %v989
      %998 = vst.msk [vmem:[#allocation5 + $0x38] sm:$0xff] %vm950, %v990
      %v999 = vld [vmem:[#allocation4 + $0x1] sm:$0xff]
      %v1000 = vld [vmem:[#allocation4 + $0x11] sm:$0xff]
      %v1001 = vld [vmem:[#allocation4 + $0x21] sm:$0xff]
      %v1002 = vld [vmem:[#allocation4 + $0x31] sm:$0xff]
      %v1003 = vld [vmem:[#allocation4 + $0x41] sm:$0xff]
      %v1004 = vld [vmem:[#allocation4 + $0x51] sm:$0xff]
      %v1005 = vld [vmem:[#allocation4 + $0x61] sm:$0xff]
      %v1006 = vld [vmem:[#allocation4 + $0x71] sm:$0xff]
      %1015 = vrot.lane.b32.xlu0 %v999, 8
      %v1016 = vpop.permute.xlu0 %1015
      %1017 = vrot.lane.b32.xlu0 %v1000, 8
      %v1018 = vpop.permute.xlu0 %1017
      %1019 = vrot.lane.b32.xlu0 %v1001, 8
      %v1020 = vpop.permute.xlu0 %1019
      %1021 = vrot.lane.b32.xlu0 %v1002, 8
      %v1022 = vpop.permute.xlu0 %1021
      %1023 = vrot.lane.b32.xlu0 %v1003, 8
      %v1024 = vpop.permute.xlu0 %1023
      %1025 = vrot.lane.b32.xlu0 %v1004, 8
      %v1026 = vpop.permute.xlu0 %1025
      %1027 = vrot.lane.b32.xlu0 %v1005, 8
      %v1028 = vpop.permute.xlu0 %1027
      %1029 = vrot.lane.b32.xlu0 %v1006, 8
      %v1030 = vpop.permute.xlu0 %1029
      %vm1039 = vcmask 130112
      %1040 = vst.msk [vmem:[#allocation5] sm:$0xff] %vm1039, %v1016
      %1041 = vst.msk [vmem:[#allocation5 + $0x8] sm:$0xff] %vm1039, %v1018
      %1042 = vst.msk [vmem:[#allocation5 + $0x10] sm:$0xff] %vm1039, %v1020
      %1043 = vst.msk [vmem:[#allocation5 + $0x18] sm:$0xff] %vm1039, %v1022
      %1044 = vst.msk [vmem:[#allocation5 + $0x20] sm:$0xff] %vm1039, %v1024
      %1045 = vst.msk [vmem:[#allocation5 + $0x28] sm:$0xff] %vm1039, %v1026
      %1046 = vst.msk [vmem:[#allocation5 + $0x30] sm:$0xff] %vm1039, %v1028
      %1047 = vst.msk [vmem:[#allocation5 + $0x38] sm:$0xff] %vm1039, %v1030
      %v1048 = vld [vmem:[#allocation4 + $0x2] sm:$0xff]
      %v1049 = vld [vmem:[#allocation4 + $0x12] sm:$0xff]
      %v1050 = vld [vmem:[#allocation4 + $0x22] sm:$0xff]
      %v1051 = vld [vmem:[#allocation4 + $0x32] sm:$0xff]
      %v1052 = vld [vmem:[#allocation4 + $0x42] sm:$0xff]
      %v1053 = vld [vmem:[#allocation4 + $0x52] sm:$0xff]
      %v1054 = vld [vmem:[#allocation4 + $0x62] sm:$0xff]
      %v1055 = vld [vmem:[#allocation4 + $0x72] sm:$0xff]
      %1064 = vrot.lane.b32.xlu0 %v1048, 16
      %v1065 = vpop.permute.xlu0 %1064
      %1066 = vrot.lane.b32.xlu0 %v1049, 16
      %v1067 = vpop.permute.xlu0 %1066
      %1068 = vrot.lane.b32.xlu0 %v1050, 16
      %v1069 = vpop.permute.xlu0 %1068
      %1070 = vrot.lane.b32.xlu0 %v1051, 16
      %v1071 = vpop.permute.xlu0 %1070
      %1072 = vrot.lane.b32.xlu0 %v1052, 16
      %v1073 = vpop.permute.xlu0 %1072
      %1074 = vrot.lane.b32.xlu0 %v1053, 16
      %v1075 = vpop.permute.xlu0 %1074
      %1076 = vrot.lane.b32.xlu0 %v1054, 16
      %v1077 = vpop.permute.xlu0 %1076
      %1078 = vrot.lane.b32.xlu0 %v1055, 16
      %v1079 = vpop.permute.xlu0 %1078
      %vm1088 = vcmask 195712
      %1089 = vst.msk [vmem:[#allocation5] sm:$0xff] %vm1088, %v1065
      %1090 = vst.msk [vmem:[#allocation5 + $0x8] sm:$0xff] %vm1088, %v1067
      %1091 = vst.msk [vmem:[#allocation5 + $0x10] sm:$0xff] %vm1088, %v1069
      %1092 = vst.msk [vmem:[#allocation5 + $0x18] sm:$0xff] %vm1088, %v1071
      %1093 = vst.msk [vmem:[#allocation5 + $0x20] sm:$0xff] %vm1088, %v1073
      %1094 = vst.msk [vmem:[#allocation5 + $0x28] sm:$0xff] %vm1088, %v1075
      %1095 = vst.msk [vmem:[#allocation5 + $0x30] sm:$0xff] %vm1088, %v1077
      %1096 = vst.msk [vmem:[#allocation5 + $0x38] sm:$0xff] %vm1088, %v1079
      %v1097 = vld [vmem:[%s957] sm:$0xff]
      %v1098 = vld [vmem:[%s957 + $0x10] sm:$0xff]
      %v1099 = vld [vmem:[%s957 + $0x20] sm:$0xff]
      %v1100 = vld [vmem:[%s957 + $0x30] sm:$0xff]
      %v1101 = vld [vmem:[%s957 + $0x40] sm:$0xff]
      %v1102 = vld [vmem:[%s957 + $0x50] sm:$0xff]
      %v1103 = vld [vmem:[%s957 + $0x60] sm:$0xff]
      %v1104 = vld [vmem:[%s957 + $0x70] sm:$0xff]
      %1113 = vrot.lane.b32.xlu0 %v1097, 24
      %v1114 = vpop.permute.xlu0 %1113
      %1115 = vrot.lane.b32.xlu0 %v1098, 24
      %v1116 = vpop.permute.xlu0 %1115
      %1117 = vrot.lane.b32.xlu0 %v1099, 24
      %v1118 = vpop.permute.xlu0 %1117
      %1119 = vrot.lane.b32.xlu0 %v1100, 24
      %v1120 = vpop.permute.xlu0 %1119
      %1121 = vrot.lane.b32.xlu0 %v1101, 24
      %v1122 = vpop.permute.xlu0 %1121
      %1123 = vrot.lane.b32.xlu0 %v1102, 24
      %v1124 = vpop.permute.xlu0 %1123
      %1125 = vrot.lane.b32.xlu0 %v1103, 24
      %v1126 = vpop.permute.xlu0 %1125
      %1127 = vrot.lane.b32.xlu0 %v1104, 24
      %v1128 = vpop.permute.xlu0 %1127
      %vm1137 = vcmask 261312
      %1138 = vst.msk [vmem:[#allocation5] sm:$0xff] %vm1137, %v1114
      %1139 = vst.msk [vmem:[#allocation5 + $0x8] sm:$0xff] %vm1137, %v1116
      %1140 = vst.msk [vmem:[#allocation5 + $0x10] sm:$0xff] %vm1137, %v1118
      %1141 = vst.msk [vmem:[#allocation5 + $0x18] sm:$0xff] %vm1137, %v1120
      %1142 = vst.msk [vmem:[#allocation5 + $0x20] sm:$0xff] %vm1137, %v1122
      %1143 = vst.msk [vmem:[#allocation5 + $0x28] sm:$0xff] %vm1137, %v1124
      %1144 = vst.msk [vmem:[#allocation5 + $0x30] sm:$0xff] %vm1137, %v1126
      %1145 = vst.msk [vmem:[#allocation5 + $0x38] sm:$0xff] %vm1137, %v1128
      %v1146 = vld [vmem:[%s957 + $0x1] sm:$0xff]
      %v1147 = vld [vmem:[%s957 + $0x11] sm:$0xff]
      %v1148 = vld [vmem:[%s957 + $0x21] sm:$0xff]
      %v1149 = vld [vmem:[%s957 + $0x31] sm:$0xff]
      %v1150 = vld [vmem:[%s957 + $0x41] sm:$0xff]
      %v1151 = vld [vmem:[%s957 + $0x51] sm:$0xff]
      %v1152 = vld [vmem:[%s957 + $0x61] sm:$0xff]
      %v1153 = vld [vmem:[%s957 + $0x71] sm:$0xff]
      %1162 = vrot.lane.b32.xlu0 %v1146, 32
      %v1163 = vpop.permute.xlu0 %1162
      %1164 = vrot.lane.b32.xlu0 %v1147, 32
      %v1165 = vpop.permute.xlu0 %1164
      %1166 = vrot.lane.b32.xlu0 %v1148, 32
      %v1167 = vpop.permute.xlu0 %1166
      %1168 = vrot.lane.b32.xlu0 %v1149, 32
      %v1169 = vpop.permute.xlu0 %1168
      %1170 = vrot.lane.b32.xlu0 %v1150, 32
      %v1171 = vpop.permute.xlu0 %1170
      %1172 = vrot.lane.b32.xlu0 %v1151, 32
      %v1173 = vpop.permute.xlu0 %1172
      %1174 = vrot.lane.b32.xlu0 %v1152, 32
      %v1175 = vpop.permute.xlu0 %1174
      %1176 = vrot.lane.b32.xlu0 %v1153, 32
      %v1177 = vpop.permute.xlu0 %1176
      %vm1186 = vcmask 326912
      %1187 = vst.msk [vmem:[#allocation5] sm:$0xff] %vm1186, %v1163
      %1188 = vst.msk [vmem:[#allocation5 + $0x8] sm:$0xff] %vm1186, %v1165
      %1189 = vst.msk [vmem:[#allocation5 + $0x10] sm:$0xff] %vm1186, %v1167
      %1190 = vst.msk [vmem:[#allocation5 + $0x18] sm:$0xff] %vm1186, %v1169
      %1191 = vst.msk [vmem:[#allocation5 + $0x20] sm:$0xff] %vm1186, %v1171
      %1192 = vst.msk [vmem:[#allocation5 + $0x28] sm:$0xff] %vm1186, %v1173
      %1193 = vst.msk [vmem:[#allocation5 + $0x30] sm:$0xff] %vm1186, %v1175
      %1194 = vst.msk [vmem:[#allocation5 + $0x38] sm:$0xff] %vm1186, %v1177
      %v1195 = vld [vmem:[%s957 + $0x2] sm:$0xff]
      %v1196 = vld [vmem:[%s957 + $0x12] sm:$0xff]
      %v1197 = vld [vmem:[%s957 + $0x22] sm:$0xff]
      %v1198 = vld [vmem:[%s957 + $0x32] sm:$0xff]
      %v1199 = vld [vmem:[%s957 + $0x42] sm:$0xff]
      %v1200 = vld [vmem:[%s957 + $0x52] sm:$0xff]
      %v1201 = vld [vmem:[%s957 + $0x62] sm:$0xff]
      %v1202 = vld [vmem:[%s957 + $0x72] sm:$0xff]
      %1211 = vrot.lane.b32.xlu0 %v1195, 40
      %v1212 = vpop.permute.xlu0 %1211
      %1213 = vrot.lane.b32.xlu0 %v1196, 40
      %v1214 = vpop.permute.xlu0 %1213
      %1215 = vrot.lane.b32.xlu0 %v1197, 40
      %v1216 = vpop.permute.xlu0 %1215
      %1217 = vrot.lane.b32.xlu0 %v1198, 40
      %v1218 = vpop.permute.xlu0 %1217
      %1219 = vrot.lane.b32.xlu0 %v1199, 40
      %v1220 = vpop.permute.xlu0 %1219
      %1221 = vrot.lane.b32.xlu0 %v1200, 40
      %v1222 = vpop.permute.xlu0 %1221
      %1223 = vrot.lane.b32.xlu0 %v1201, 40
      %v1224 = vpop.permute.xlu0 %1223
      %1225 = vrot.lane.b32.xlu0 %v1202, 40
      %v1226 = vpop.permute.xlu0 %1225
      %vm1235 = vcmask 392512
      %1236 = vst.msk [vmem:[#allocation5] sm:$0xff] %vm1235, %v1212
      %1237 = vst.msk [vmem:[#allocation5 + $0x8] sm:$0xff] %vm1235, %v1214
      %1238 = vst.msk [vmem:[#allocation5 + $0x10] sm:$0xff] %vm1235, %v1216
      %1239 = vst.msk [vmem:[#allocation5 + $0x18] sm:$0xff] %vm1235, %v1218
      %1240 = vst.msk [vmem:[#allocation5 + $0x20] sm:$0xff] %vm1235, %v1220
      %1241 = vst.msk [vmem:[#allocation5 + $0x28] sm:$0xff] %vm1235, %v1222
      %1242 = vst.msk [vmem:[#allocation5 + $0x30] sm:$0xff] %vm1235, %v1224
      %1243 = vst.msk [vmem:[#allocation5 + $0x38] sm:$0xff] %vm1235, %v1226
      %s1244 = scalar_lea.vmem [#allocation4], 32
      %v1245 = vld [vmem:[%s1244] sm:$0xff]
      %v1246 = vld [vmem:[%s1244 + $0x10] sm:$0xff]
      %v1247 = vld [vmem:[%s1244 + $0x20] sm:$0xff]
      %v1248 = vld [vmem:[%s1244 + $0x30] sm:$0xff]
      %v1249 = vld [vmem:[%s1244 + $0x40] sm:$0xff]
      %v1250 = vld [vmem:[%s1244 + $0x50] sm:$0xff]
      %v1251 = vld [vmem:[%s1244 + $0x60] sm:$0xff]
      %v1252 = vld [vmem:[%s1244 + $0x70] sm:$0xff]
      %1261 = vrot.lane.b32.xlu0 %v1245, 48
      %v1262 = vpop.permute.xlu0 %1261
      %1263 = vrot.lane.b32.xlu0 %v1246, 48
      %v1264 = vpop.permute.xlu0 %1263
      %1265 = vrot.lane.b32.xlu0 %v1247, 48
      %v1266 = vpop.permute.xlu0 %1265
      %1267 = vrot.lane.b32.xlu0 %v1248, 48
      %v1268 = vpop.permute.xlu0 %1267
      %1269 = vrot.lane.b32.xlu0 %v1249, 48
      %v1270 = vpop.permute.xlu0 %1269
      %1271 = vrot.lane.b32.xlu0 %v1250, 48
      %v1272 = vpop.permute.xlu0 %1271
      %1273 = vrot.lane.b32.xlu0 %v1251, 48
      %v1274 = vpop.permute.xlu0 %1273
      %1275 = vrot.lane.b32.xlu0 %v1252, 48
      %v1276 = vpop.permute.xlu0 %1275
      %vm1285 = vcmask 458112
      %1286 = vst.msk [vmem:[#allocation5] sm:$0xff] %vm1285, %v1262
      %1287 = vst.msk [vmem:[#allocation5 + $0x8] sm:$0xff] %vm1285, %v1264
      %1288 = vst.msk [vmem:[#allocation5 + $0x10] sm:$0xff] %vm1285, %v1266
      %1289 = vst.msk [vmem:[#allocation5 + $0x18] sm:$0xff] %vm1285, %v1268
      %1290 = vst.msk [vmem:[#allocation5 + $0x20] sm:$0xff] %vm1285, %v1270
      %1291 = vst.msk [vmem:[#allocation5 + $0x28] sm:$0xff] %vm1285, %v1272
      %1292 = vst.msk [vmem:[#allocation5 + $0x30] sm:$0xff] %vm1285, %v1274
      %1293 = vst.msk [vmem:[#allocation5 + $0x38] sm:$0xff] %vm1285, %v1276
      %v1294 = vld [vmem:[%s1244 + $0x1] sm:$0xff]
      %v1295 = vld [vmem:[%s1244 + $0x11] sm:$0xff]
      %v1296 = vld [vmem:[%s1244 + $0x21] sm:$0xff]
      %v1297 = vld [vmem:[%s1244 + $0x31] sm:$0xff]
      %v1298 = vld [vmem:[%s1244 + $0x41] sm:$0xff]
      %v1299 = vld [vmem:[%s1244 + $0x51] sm:$0xff]
      %v1300 = vld [vmem:[%s1244 + $0x61] sm:$0xff]
      %v1301 = vld [vmem:[%s1244 + $0x71] sm:$0xff]
      %1310 = vrot.lane.b32.xlu0 %v1294, 56
      %v1311 = vpop.permute.xlu0 %1310
      %1312 = vrot.lane.b32.xlu0 %v1295, 56
      %v1313 = vpop.permute.xlu0 %1312
      %1314 = vrot.lane.b32.xlu0 %v1296, 56
      %v1315 = vpop.permute.xlu0 %1314
      %1316 = vrot.lane.b32.xlu0 %v1297, 56
      %v1317 = vpop.permute.xlu0 %1316
      %1318 = vrot.lane.b32.xlu0 %v1298, 56
      %v1319 = vpop.permute.xlu0 %1318
      %1320 = vrot.lane.b32.xlu0 %v1299, 56
      %v1321 = vpop.permute.xlu0 %1320
      %1322 = vrot.lane.b32.xlu0 %v1300, 56
      %v1323 = vpop.permute.xlu0 %1322
      %1324 = vrot.lane.b32.xlu0 %v1301, 56
      %v1325 = vpop.permute.xlu0 %1324
      %vm1334 = vcmask 523712
      %1335 = vst.msk [vmem:[#allocation5] sm:$0xff] %vm1334, %v1311
      %1336 = vst.msk [vmem:[#allocation5 + $0x8] sm:$0xff] %vm1334, %v1313
      %1337 = vst.msk [vmem:[#allocation5 + $0x10] sm:$0xff] %vm1334, %v1315
      %1338 = vst.msk [vmem:[#allocation5 + $0x18] sm:$0xff] %vm1334, %v1317
      %1339 = vst.msk [vmem:[#allocation5 + $0x20] sm:$0xff] %vm1334, %v1319
      %1340 = vst.msk [vmem:[#allocation5 + $0x28] sm:$0xff] %vm1334, %v1321
      %1341 = vst.msk [vmem:[#allocation5 + $0x30] sm:$0xff] %vm1334, %v1323
      %1342 = vst.msk [vmem:[#allocation5 + $0x38] sm:$0xff] %vm1334, %v1325
      %v1343 = vld [vmem:[%s1244 + $0x2] sm:$0xff]
      %v1344 = vld [vmem:[%s1244 + $0x12] sm:$0xff]
      %v1345 = vld [vmem:[%s1244 + $0x22] sm:$0xff]
      %v1346 = vld [vmem:[%s1244 + $0x32] sm:$0xff]
      %v1347 = vld [vmem:[%s1244 + $0x42] sm:$0xff]
      %v1348 = vld [vmem:[%s1244 + $0x52] sm:$0xff]
      %v1349 = vld [vmem:[%s1244 + $0x62] sm:$0xff]
      %v1350 = vld [vmem:[%s1244 + $0x72] sm:$0xff]
      %1359 = vrot.lane.b32.xlu0 %v1343, 64
      %v1360 = vpop.permute.xlu0 %1359
      %1361 = vrot.lane.b32.xlu0 %v1344, 64
      %v1362 = vpop.permute.xlu0 %1361
      %1363 = vrot.lane.b32.xlu0 %v1345, 64
      %v1364 = vpop.permute.xlu0 %1363
      %1365 = vrot.lane.b32.xlu0 %v1346, 64
      %v1366 = vpop.permute.xlu0 %1365
      %1367 = vrot.lane.b32.xlu0 %v1347, 64
      %v1368 = vpop.permute.xlu0 %1367
      %1369 = vrot.lane.b32.xlu0 %v1348, 64
      %v1370 = vpop.permute.xlu0 %1369
      %1371 = vrot.lane.b32.xlu0 %v1349, 64
      %v1372 = vpop.permute.xlu0 %1371
      %1373 = vrot.lane.b32.xlu0 %v1350, 64
      %v1374 = vpop.permute.xlu0 %1373
      %vm1383 = vcmask 589312
      %1384 = vst.msk [vmem:[#allocation5] sm:$0xff] %vm1383, %v1360
      %1385 = vst.msk [vmem:[#allocation5 + $0x8] sm:$0xff] %vm1383, %v1362
      %1386 = vst.msk [vmem:[#allocation5 + $0x10] sm:$0xff] %vm1383, %v1364
      %1387 = vst.msk [vmem:[#allocation5 + $0x18] sm:$0xff] %vm1383, %v1366
      %1388 = vst.msk [vmem:[#allocation5 + $0x20] sm:$0xff] %vm1383, %v1368
      %1389 = vst.msk [vmem:[#allocation5 + $0x28] sm:$0xff] %vm1383, %v1370
      %1390 = vst.msk [vmem:[#allocation5 + $0x30] sm:$0xff] %vm1383, %v1372
      %1391 = vst.msk [vmem:[#allocation5 + $0x38] sm:$0xff] %vm1383, %v1374
      %v1392 = vld [vmem:[#allocation5] sm:$0xff]
      %v1393 = vld [vmem:[#allocation5 + $0x8] sm:$0xff]
      %v1394 = vld [vmem:[#allocation5 + $0x10] sm:$0xff]
      %v1395 = vld [vmem:[#allocation5 + $0x18] sm:$0xff]
      %v1396 = vld [vmem:[#allocation5 + $0x20] sm:$0xff]
      %v1397 = vld [vmem:[#allocation5 + $0x28] sm:$0xff]
      %v1398 = vld [vmem:[#allocation5 + $0x30] sm:$0xff]
      %v1399 = vld [vmem:[#allocation5 + $0x38] sm:$0xff]
      %v1400 = vld [vmem:[%s3] sm:$0xff]
      %v1401 = vld [vmem:[%s3 + $0x8] sm:$0xff]
      %v1402 = vld [vmem:[%s3 + $0x10] sm:$0xff]
      %v1403 = vld [vmem:[%s3 + $0x18] sm:$0xff]
      %v1404 = vld [vmem:[%s3 + $0x20] sm:$0xff]
      %v1405 = vld [vmem:[%s3 + $0x28] sm:$0xff]
      %v1406 = vld [vmem:[%s3 + $0x30] sm:$0xff]
      %v1407 = vld [vmem:[%s3 + $0x38] sm:$0xff]
      %v1408 = vld [vmem:[%s3 + $0x40] sm:$0xff]
      %v1409 = vld [vmem:[%s4] sm:$0x1]
      %v1411 = vlaneseq
      %v1412 = vshrl.u32 %v1411, 7
      %v1413 = vsub.s32 0, %v1412
      %v1414 = vrot.slane %v1409, %v1413
      %vm1416 = vcmask 588800
      %v1418 = vsel %vm1416, %v1392, 0
      %v1421 = vsel %vm1416, %v1393, 0
      %v1424 = vsel %vm1416, %v1394, 0
      %v1427 = vsel %vm1416, %v1395, 0
      %v1430 = vsel %vm1416, %v1396, 0
      %v1433 = vsel %vm1416, %v1397, 0
      %v1436 = vsel %vm1416, %v1398, 0
      %v1439 = vsel %vm1416, %v1399, 0
      %1441 = vmatprep.subr.mxu0 0.0
      %1442 = vmatpush1.msra.mxu0 %v1400
      %1443 = vmatprep.subr.mxu0 0.0
      %1444 = vmatpush1.msra.mxu0 %v1401
      %1445 = vmatprep.subr.mxu0 0.0
      %1446 = vmatpush1.msra.mxu0 %v1402
      %1447 = vmatprep.subr.mxu0 0.0
      %1448 = vmatpush1.msra.mxu0 %v1403
      %1449 = vmatprep.subr.mxu0 0.0
      %1450 = vmatpush1.msra.mxu0 %v1404
      %1451 = vmatprep.subr.mxu0 0.0
      %1452 = vmatpush1.msra.mxu0 %v1405
      %1453 = vmatprep.subr.mxu0 0.0
      %1454 = vmatpush1.msra.mxu0 %v1406
      %1455 = vmatprep.subr.mxu0 0.0
      %1456 = vmatpush1.msra.mxu0 %v1407
      %1457 = vmatprep.subr.mxu0 0.0
      %1458 = vmatpush1.msra.mxu0 %v1408
      %1459 = vmatprep.subr.mxu0 0.0
      %1460 = vmatpush1.msra.mxu0 0.0
      %1461 = vmatprep.subr.mxu0 0.0
      %1462 = vmatpush1.msra.mxu0 0.0
      %1463 = vmatprep.subr.mxu0 0.0
      %1464 = vmatpush1.msra.mxu0 0.0
      %1465 = vmatprep.subr.mxu0 0.0
      %1466 = vmatpush1.msra.mxu0 0.0
      %1467 = vmatprep.subr.mxu0 0.0
      %1468 = vmatpush1.msra.mxu0 0.0
      %1469 = vmatprep.subr.mxu0 0.0
      %1470 = vmatpush1.msra.mxu0 0.0
      %1471 = vmatprep.subr.mxu0 0.0
      %1472 = vmatpush1.msra.mxu0 0.0
      %1473 = vmatprep.subr.mxu0 0.0
      %1474 = vmatpush1.msra.mxu0 0.0
      %1475 = vmatprep.subr.mxu0 0.0
      %1476 = vmatpush1.msra.mxu0 0.0
      %1477 = vmatprep.subr.mxu0 0.0
      %1478 = vmatpush1.msra.mxu0 0.0
      %1479 = vmatprep.subr.mxu0 0.0
      %1480 = vmatpush1.msra.mxu0 0.0
      %1481 = vmatprep.subr.mxu0 0.0
      %1482 = vmatpush1.msra.mxu0 0.0
      %1483 = vmatprep.subr.mxu0 0.0
      %1484 = vmatpush1.msra.mxu0 0.0
      %1485 = vmatprep.subr.mxu0 0.0
      %1486 = vmatpush1.msra.mxu0 0.0
      %1487 = vmatprep.subr.mxu0 0.0
      %1488 = vmatpush1.msra.mxu0 0.0
      %1489 = vmatprep.subr.mxu0 0.0
      %1490 = vmatpush1.msra.mxu0 0.0
      %1491 = vmatprep.subr.mxu0 0.0
      %1492 = vmatpush1.msra.mxu0 0.0
      %1493 = vmatprep.subr.mxu0 0.0
      %1494 = vmatpush1.msra.mxu0 0.0
      %1495 = vmatprep.subr.mxu0 0.0
      %1496 = vmatpush1.msra.mxu0 0.0
      %1497 = vmatprep.subr.mxu0 0.0
      %1498 = vmatpush1.msra.mxu0 0.0
      %1499 = vmatprep.subr.mxu0 0.0
      %1500 = vmatpush1.msra.mxu0 0.0
      %1501 = vmatprep.subr.mxu0 0.0
      %1502 = vmatpush1.msra.mxu0 0.0
      %1503 = vmatprep.subr.mxu0 0.0
      %1504 = vmatpush1.msra.mxu0 0.0
      %1505 = vmatprep.mubr.f32.mxu0 0.0
      %1506 = vmatmul.mubr.f32.gmra.mrb[0].mxu0 %v1418
      %v1507 = vpop.f32.mrb[0].mxu0
      %v1508 = vadd.f32 %v1414, %v1507
      %v1509 = vpop.f32.mrb[0].mxu0
      %1510 = vmatprep.mubr.f32.mxu0 0.0
      %1511 = vmatmul.mubr.f32.gmra.mrb[0].mxu0 %v1421
      %v1512 = vpop.f32.mrb[0].mxu0
      %v1513 = vadd.f32 %v1414, %v1512
      %v1514 = vpop.f32.mrb[0].mxu0
      %1515 = vmatprep.mubr.f32.mxu0 0.0
      %1516 = vmatmul.mubr.f32.gmra.mrb[0].mxu0 %v1424
      %v1517 = vpop.f32.mrb[0].mxu0
      %v1518 = vadd.f32 %v1414, %v1517
      %v1519 = vpop.f32.mrb[0].mxu0
      %1520 = vmatprep.mubr.f32.mxu0 0.0
      %1521 = vmatmul.mubr.f32.gmra.mrb[0].mxu0 %v1427
      %v1522 = vpop.f32.mrb[0].mxu0
      %v1523 = vadd.f32 %v1414, %v1522
      %v1524 = vpop.f32.mrb[0].mxu0
      %1525 = vmatprep.mubr.f32.mxu0 0.0
      %1526 = vmatmul.mubr.f32.gmra.mrb[0].mxu0 %v1430
      %v1527 = vpop.f32.mrb[0].mxu0
      %v1528 = vadd.f32 %v1414, %v1527
      %v1529 = vpop.f32.mrb[0].mxu0
      %1530 = vmatprep.mubr.f32.mxu0 0.0
      %1531 = vmatmul.mubr.f32.gmra.mrb[0].mxu0 %v1433
      %v1532 = vpop.f32.mrb[0].mxu0
      %v1533 = vadd.f32 %v1414, %v1532
      %v1534 = vpop.f32.mrb[0].mxu0
      %1535 = vmatprep.mubr.f32.mxu0 0.0
      %1536 = vmatmul.mubr.f32.gmra.mrb[0].mxu0 %v1436
      %v1537 = vpop.f32.mrb[0].mxu0
      %v1538 = vadd.f32 %v1414, %v1537
      %v1539 = vpop.f32.mrb[0].mxu0
      %1540 = vmatprep.mubr.f32.mxu0 0.0
      %1541 = vmatmul.mubr.f32.gmra.mrb[0].mxu0 %v1439
      %v1542 = vpop.f32.mrb[0].mxu0
      %v1543 = vadd.f32 %v1414, %v1542
      %v1544 = vpop.f32.mrb[0].mxu0
      %1545 = vdwg.mxu0
      %vm1546 = vcmp.ge.f32.partialorder %v1508, 0.0
      %vm1547 = vcmp.ge.f32.partialorder %v1513, 0.0
      %vm1548 = vcmp.ge.f32.partialorder %v1518, 0.0
      %vm1549 = vcmp.ge.f32.partialorder %v1523, 0.0
      %vm1550 = vcmp.ge.f32.partialorder %v1528, 0.0
      %vm1551 = vcmp.ge.f32.partialorder %v1533, 0.0
      %vm1552 = vcmp.ge.f32.partialorder %v1538, 0.0
      %vm1553 = vcmp.ge.f32.partialorder %v1543, 0.0
      %v1554 = vmul.f32 %v1508, 0.01
      %v1555 = vmul.f32 %v1513, 0.01
      %v1556 = vmul.f32 %v1518, 0.01
      %v1557 = vmul.f32 %v1523, 0.01
      %v1558 = vmul.f32 %v1528, 0.01
      %v1559 = vmul.f32 %v1533, 0.01
      %v1560 = vmul.f32 %v1538, 0.01
      %v1561 = vmul.f32 %v1543, 0.01
      %v1562 = vsel %vm1546, %v1508, %v1554
      %v1563 = vsel %vm1547, %v1513, %v1555
      %v1564 = vsel %vm1548, %v1518, %v1556
      %v1565 = vsel %vm1549, %v1523, %v1557
      %v1566 = vsel %vm1550, %v1528, %v1558
      %v1567 = vsel %vm1551, %v1533, %v1559
      %v1568 = vsel %vm1552, %v1538, %v1560
      %v1569 = vsel %vm1553, %v1543, %v1561
      %1570 = vst.msk [vmem:[%s224] sm:$0xff] %vm950, %v1562
      %1571 = vst.msk [vmem:[%s224 + $0x8] sm:$0xff] %vm950, %v1563
      %1572 = vst.msk [vmem:[%s224 + $0x10] sm:$0xff] %vm950, %v1564
      %1573 = vst.msk [vmem:[%s224 + $0x18] sm:$0xff] %vm950, %v1565
      %1574 = vst.msk [vmem:[%s224 + $0x20] sm:$0xff] %vm950, %v1566
      %1575 = vst.msk [vmem:[%s224 + $0x28] sm:$0xff] %vm950, %v1567
      %1576 = vst.msk [vmem:[%s224 + $0x30] sm:$0xff] %vm950, %v1568
      %1577 = vst.msk [vmem:[%s224 + $0x38] sm:$0xff] %vm950, %v1569
      %s1578 = smul.u32 8, %s16
      %p1579 = scmp.lt.s32.totalorder %s1578, 15
      %s1580 = scalar_select %p1579, %s1578, 15
      %s1581 = smul.addr %s1580, 8
      %s1582 = scalar_lea.vmem %s5, %s1581
      // Predicated region
      $region41: #{tpu_custom_call.1} parent=39 // pred_check
        %p1583 = pneg %p144
      $region42: #{tpu_custom_call.1} parent=39 // pred_check_branch
        %1585 = sbr.rel (%p1583) target = $region44
      $region43: #{tpu_custom_call.1} parent=39 // pred_region
        %s1586 = smul.u32 8, %s16
      $region44: #{tpu_custom_call.1} parent=39 // pred_fallthru
        _
    $region40: #{tpu_custom_call.1} parent=5 // pred_fallthru
      _
    %p1587 = scmp.le.s32.totalorder 2, %s11
    // Predicated region
    $region45: #{tpu_custom_call.1} parent=5 // pred_check
      %p1588 = pneg %p1587
    $region46: #{tpu_custom_call.1} parent=5 // pred_check_branch
      %1590 = sbr.rel (%p1588) target = $region48
    $region47: #{tpu_custom_call.1} parent=5 // pred_region
      %s1591 = ssub.s32 %s11, 2
      // Predicated region
      $region49: #{tpu_custom_call.1} parent=47 // pred_check
        %p1592 = pneg %p150
      $region50: #{tpu_custom_call.1} parent=47 // pred_check_branch
        %1594 = sbr.rel (%p1592) target = $region52
      $region51: #{tpu_custom_call.1} parent=47 // pred_region
        %s1595 = smul.u32 8, %s17
        %p1596 = scmp.lt.s32.totalorder %s1595, 15
        %s1597 = scalar_select %p1596, %s1595, 15
        %s1598 = smul.addr %s1597, 8
        %s1599 = scalar_lea.vmem %s5, %s1598
      $region52: #{tpu_custom_call.1} parent=47 // pred_fallthru
        _
    $region48: #{tpu_custom_call.1} parent=5 // pred_fallthru
      _
  $region6: #{tpu_custom_call.1} parent=0 // loop_footer
    %s15 = sadd.s32 1, %s11
  $region7: #{tpu_custom_call.1} parent=0 // loop_footer_branch
    %10 = sbr.rel target = $region3
  $region8: #{tpu_custom_call.1} parent=0 // loop_exit
    _

</llo_original>
